<compile_context>
chip_gen: v7x
topology: tpu7x:2x2x1
jax: 0.10.0
libtpu: 0.0.40
codegen_flags: <defaults>
</compile_context>

<pallas_src>
import functools

import jax
import jax.numpy as jnp
from jax import lax
from jax.experimental import pallas as pl
from jax.experimental.pallas import tpu as pltpu

NBINS = 256


def _hist_stats_kernel(fake_ref, ref_ref, msrc_ref, mtar_ref, stats_ref, *, nbins):
    """Accumulate per-bin masked histogram stats for one channel over one pixel tile.

    Grid: (channel, pixel_tile).  Output block (3, nbins, 4) holds, for this channel,
    rows [N_src, N_tar, S_src] with the 4 regions on lanes.
    """
    f32 = jnp.float32

    @pl.when(pl.program_id(1) == 0)
    def _init():
        stats_ref[...] = jnp.zeros_like(stats_ref)

    def denorm255(v):
        # de_norm: (x+1)/2 clamped to [0,1], then *255
        return jnp.clip((v + 1.0) * 0.5, 0.0, 1.0) * 255.0

    x = denorm255(fake_ref[0])          # (1, T) source channel, values in [0, 255]
    y = denorm255(ref_ref[0])           # (1, T) target channel
    msrc = msrc_ref[...]                # (T, 4) 0/1 source-region masks
    mtar = mtar_ref[...]                # (T, 4) 0/1 target-region masks

    bins_col = lax.broadcasted_iota(jnp.int32, (nbins, 1), 0)   # (256, 1)
    xb = jnp.floor(x).astype(jnp.int32)                          # unit-width histc bins
    yb = jnp.floor(y).astype(jnp.int32)

    eq_x = xb == bins_col               # (256, T) bool one-hot over bins (built once/chan)
    eq_y = yb == bins_col

    msrc_bf = msrc.astype(jnp.bfloat16)
    mtar_bf = mtar.astype(jnp.bfloat16)

    # Per-bin masked counts for all 4 regions at once, on the MXU (0/1 exact in bf16).
    stats_ref[0] += jnp.dot(eq_x.astype(jnp.bfloat16), msrc_bf,
                            preferred_element_type=f32)
    stats_ref[1] += jnp.dot(eq_y.astype(jnp.bfloat16), mtar_bf,
                            preferred_element_type=f32)
    # Per-bin masked source value sums (f32 matmul to keep value precision).
    stats_ref[2] += jnp.dot(jnp.where(eq_x, x, 0.0), msrc,
                            preferred_element_type=f32)


def _finalize_kernel(srcN_ref, srcS_ref, tarN_ref, out_ref, *,
                     nbins, npix, lam_face, lam_hair, lam_eye):
    """CDFs -> cal_trans transfer tables -> per-bin masked L1 -> weighted sum."""
    f32 = jnp.float32
    srcN = srcN_ref[...]        # (3, 256, 4)  per-bin source counts
    srcS = srcS_ref[...]        # (3, 256, 4)  per-bin masked source sums
    tarN = tarN_ref[...]        # (3, 4, 256)  per-bin target counts (bins on lanes)

    rows = lax.broadcasted_iota(jnp.int32, (nbins, nbins), 0)
    cols = lax.broadcasted_iota(jnp.int32, (nbins, nbins), 1)
    bins_col = lax.broadcasted_iota(jnp.int32, (nbins, 1), 0)
    ltri = (cols <= rows).astype(f32)       # ltri[i, j] = (j <= i)
    utri = (rows <= cols).astype(f32)       # utri[j, k] = (j <= k)

    lams = (lam_face, lam_hair, lam_eye, lam_eye)

    # Region pixel counts (identical across channels) and empty-region guards.
    n_src = jnp.sum(srcN[0], axis=0, keepdims=True)      # (1, 4)
    n_tar = jnp.sum(tarN[0], axis=1, keepdims=True)      # (4, 1)
    inv_src = 1.0 / jnp.maximum(n_src, 1.0)              # exact divide (no approx recip)
    inv_tar = 1.0 / jnp.maximum(n_tar, 1.0)

    total = jnp.zeros((1, 1), f32)
    for c in range(3):
        # Cumulative histograms via triangular matmuls (exact for integer counts in f32).
        cdf_src_all = jnp.dot(ltri, srcN[c], preferred_element_type=f32) * inv_src  # (256,4)
        cdf_tar_all = jnp.dot(tarN[c], utri, preferred_element_type=f32) * inv_tar  # (4,256)
        for r in range(4):
            cdf_src = cdf_src_all[:, r:r + 1]                                   # (256, 1)
            cdf_tar = cdf_tar_all[r:r + 1, :]                                   # (1, 256)
            cdf_tar_prev = jnp.concatenate(
                [jnp.zeros((1, 1), f32), cdf_tar[:, :nbins - 1]], axis=1)       # (1, 256)
            # cal_trans: table[i] = first j in [1,255] with
            #            cdf_tar[j-1] <= cdf_src[i] <= cdf_tar[j], else i; table[255]=255.
            cond = (cdf_tar_prev <= cdf_src) & (cdf_src <= cdf_tar) & (cols >= 1)
            first_j = jnp.min(jnp.where(cond, cols, nbins), axis=1, keepdims=True)
            table = jnp.where((bins_col >= 1) & (first_j < nbins), first_j, bins_col)
            table = jnp.where(bins_col == nbins - 1, nbins - 1, table).astype(f32)  # (256,1)

            # Masked L1 via per-bin identity: every masked pixel in unit bin b lies on the
            # same side of integer table[b], so sum_b sum_p |x - table[b]| = sum_b |S - t*N|.
            N_col = srcN[c, :, r:r + 1]
            S_col = srcS[c, :, r:r + 1]
            l1_cr = jnp.sum(jnp.abs(S_col - table * N_col), keepdims=True)      # (1, 1)

            valid = jnp.logical_and(n_src[:, r:r + 1] > 0.0,
                                    n_tar[r:r + 1, :] > 0.0).astype(f32)        # (1, 1)
            # nn.L1Loss() default reduction = mean over the full (3,H,W) tensor.
            total = total + f32(lams[r]) * valid * l1_cr / f32(3 * npix)
    out_ref[...] = total


def hm_loss(fake_A, ref_B, mask_A, mask_B,
            lambda_his_face=0.1, lambda_his_hair=0.1, lambda_his_eye=0.1,
            p_tile=2048):
    """fake_A, ref_B: (1,3,H,W) in [-1,1]; mask_A, mask_B: (1,1,H,W) float labels (0..18)."""
    b, C, H, W = fake_A.shape
    assert b == 1 and C == 3 and H == W, "module assumes batch-1 square 3-channel images"
    P = H * W
    f32 = jnp.float32

    fake2d = fake_A.reshape(3, P).astype(f32)
    ref2d = ref_B.reshape(3, P).astype(f32)
    ma = mask_A.reshape(P).astype(f32)
    mb = mask_B.reshape(P).astype(f32)

    def is_any(m, labels):
        acc = jnp.zeros(m.shape, jnp.bool_)
        for l in labels:
            acc = acc | (m == f32(l))
        return acc

    FACE = (1, 10, 14, 7, 8)
    # Region masks (regions on lanes of a (P, 4) stack): face, hair, eye-left, eye-right.
    src_stack = jnp.stack(
        [is_any(ma, FACE + (11,)),
         is_any(ma, (17,)),
         is_any(ma, (4, 2)),
         is_any(ma, (5, 3))], axis=1).astype(f32)                  # (P, 4)
    # Reference quirk replicated: mask_B_face includes (mask_A == 11).
    tar_stack = jnp.stack(
        [is_any(mb, FACE) | is_any(ma, (11,)),
         is_any(mb, (17,)),
         is_any(mb, (4, 2)),
         is_any(mb, (5, 3))], axis=1).astype(f32)                  # (P, 4)

    # Pixel tiling: lane-major tiles, multiple of 128; pad P with mask-0 pixels.
    p_tile = max(128, (int(p_tile) // 128) * 128)
    p_tile = min(p_tile, ((P + 127) // 128) * 128)
    num_tiles = pl.cdiv(P, p_tile)
    P_pad = num_tiles * p_tile
    pad = P_pad - P
    if pad:
        fake2d = jnp.pad(fake2d, ((0, 0), (0, pad)))
        ref2d = jnp.pad(ref2d, ((0, 0), (0, pad)))
        src_stack = jnp.pad(src_stack, ((0, pad), (0, 0)))
        tar_stack = jnp.pad(tar_stack, ((0, pad), (0, 0)))
    fake3d = fake2d.reshape(3, 1, P_pad)
    ref3d = ref2d.reshape(3, 1, P_pad)

    # Pass 1: tiled accumulation of per-bin masked stats on a (channel, tile) grid.
    stats = pl.pallas_call(
        functools.partial(_hist_stats_kernel, nbins=NBINS),
        out_shape=jax.ShapeDtypeStruct((9, NBINS, 4), f32),
        grid=(3, num_tiles),
        in_specs=[
            pl.BlockSpec((1, 1, p_tile), lambda c, t: (c, 0, t)),
            pl.BlockSpec((1, 1, p_tile), lambda c, t: (c, 0, t)),
            pl.BlockSpec((p_tile, 4), lambda c, t: (t, 0)),
            pl.BlockSpec((p_tile, 4), lambda c, t: (t, 0)),
        ],
        out_specs=pl.BlockSpec((3, NBINS, 4), lambda c, t: (c, 0, 0)),
        compiler_params=pltpu.CompilerParams(
            dimension_semantics=("parallel", "arbitrary"),
            vmem_limit_bytes=40 * 1024 * 1024),
    )(fake3d, ref3d, src_stack, tar_stack)

    # Tiny layout plumbing between passes (36 KB of data).
    stats = stats.reshape(3, 3, NBINS, 4)
    src_counts = stats[:, 0]                                   # (3, 256, 4)
    tar_counts = jnp.transpose(stats[:, 1], (0, 2, 1))         # (3, 4, 256) bins on lanes
    src_sums = stats[:, 2]                                     # (3, 256, 4)

    # Pass 2: finalize (CDFs, cal_trans tables, per-bin masked L1, weighted sum).
    out = pl.pallas_call(
        functools.partial(_finalize_kernel, nbins=NBINS, npix=P,
                          lam_face=float(lambda_his_face),
                          lam_hair=float(lambda_his_hair),
                          lam_eye=float(lambda_his_eye)),
        out_shape=jax.ShapeDtypeStruct((1, 1), f32),
        grid=(1,),
        in_specs=[
            pl.BlockSpec((3, NBINS, 4), lambda i: (0, 0, 0)),
            pl.BlockSpec((3, NBINS, 4), lambda i: (0, 0, 0)),
            pl.BlockSpec((3, 4, NBINS), lambda i: (0, 0, 0)),
        ],
        out_specs=pl.BlockSpec((1, 1), lambda i: (0, 0)),
        compiler_params=pltpu.CompilerParams(
            dimension_semantics=("arbitrary",)),
    )(src_counts, src_sums, tar_counts)
    return out[0, 0]


if __name__ == "__main__":
    key = jax.random.PRNGKey(0)
    k1, k2 = jax.random.split(key)
    H = W = 32

    fake_A = jax.random.uniform(k1, (1, 3, H, W), jnp.float32, minval=-1.0, maxval=1.0)
    ref_B = jax.random.uniform(k2, (1, 3, H, W), jnp.float32, minval=-1.0, maxval=1.0)

    # Deterministic face-parsing-style label maps containing every region the module
    # uses (face 1/7/8/10/11/14, hair 17, eyes 2/3/4/5).
    labels = jnp.zeros((H, W), jnp.int32)
    labels = labels.at[0:8, :].set(17)          # hair
    labels = labels.at[8:24, :].set(1)          # face skin
    labels = labels.at[24:26, 0:8].set(10)
    labels = labels.at[24:26, 8:16].set(14)
    labels = labels.at[26:28, 0:8].set(7)
    labels = labels.at[26:28, 8:16].set(8)
    labels = labels.at[28:30, 0:8].set(11)
    labels = labels.at[12:14, 4:8].set(4)       # left eye
    labels = labels.at[14:16, 4:8].set(2)
    labels = labels.at[12:14, 20:24].set(5)     # right eye
    labels = labels.at[14:16, 20:24].set(3)

    mask_A = labels.astype(jnp.float32).reshape(1, 1, H, W)
    mask_B = jnp.roll(labels, shift=2, axis=1).astype(jnp.float32).reshape(1, 1, H, W)

    # Small p_tile to exercise the multi-tile accumulation path (P = 1024 -> 4 tiles).
    loss = hm_loss(fake_A, ref_B, mask_A, mask_B, p_tile=256)
    loss = jax.block_until_ready(loss)
    assert bool(jnp.isfinite(loss)), f"non-finite loss: {loss}"
    print("KERNEL_OK")
</pallas_src>

<mosaic_0001>
module attributes {stable_mosaic.version = 11 : i64} {
  func.func @_hist_stats_kernel(%arg0: i32, %arg1: i32, %arg2: memref<1x1x256xf32, #tpu.memory_space<vmem>>, %arg3: memref<1x1x256xf32, #tpu.memory_space<vmem>>, %arg4: memref<256x4xf32, #tpu.memory_space<vmem>>, %arg5: memref<256x4xf32, #tpu.memory_space<vmem>>, %arg6: memref<3x256x4xf32, #tpu.memory_space<vmem>>) attributes {dimension_semantics = [#tpu.dimension_semantics<parallel>, #tpu.dimension_semantics<arbitrary>], iteration_bounds = array<i64: 3, 4>, scalar_prefetch = 0 : i64, scratch_operands = 0 : i64, tpu.core_type = #tpu.core_type<tc>, window_params = [{transform_indices = @transform_0, window_bounds = array<i64: 1, 1, 256>}, {transform_indices = @transform_1, window_bounds = array<i64: 1, 1, 256>}, {transform_indices = @transform_2, window_bounds = array<i64: 256, 4>}, {transform_indices = @transform_3, window_bounds = array<i64: 256, 4>}, {transform_indices = @transform_4, window_bounds = array<i64: 3, 256, 4>}]} {
    %c0_i32 = arith.constant 0 : i32
    %0 = arith.cmpi eq, %arg1, %c0_i32 : i32
    %1 = arith.extui %0 : i1 to i32
    %c0_i32_0 = arith.constant 0 : i32
    %2 = arith.cmpi ne, %1, %c0_i32_0 : i32
    scf.if %2 {
      %cst_39 = arith.constant 0.000000e+00 : f32
      %73 = vector.broadcast %cst_39 : f32 to vector<3x256x4xf32>
      %c0_40 = arith.constant 0 : index
      %c0_41 = arith.constant 0 : index
      %c0_42 = arith.constant 0 : index
      %74 = vector.load %arg6[%c0_40, %c0_41, %c0_42] : memref<3x256x4xf32, #tpu.memory_space<vmem>>, vector<3x256x4xf32>
      tpu.vector_store %arg6[%c0_40, %c0_41, %c0_42], %73 {strides = array<i32>} : memref<3x256x4xf32, #tpu.memory_space<vmem>>, vector<3x256x4xf32>,
    } else {
    }
    %c0 = arith.constant 0 : index
    %c0_1 = arith.constant 0 : index
    %c0_2 = arith.constant 0 : index
    %3 = vector.load %arg2[%c0, %c0_1, %c0_2] : memref<1x1x256xf32, #tpu.memory_space<vmem>>, vector<1x1x256xf32>
    %4 = vector.shape_cast %3 : vector<1x1x256xf32> to vector<1x256xf32>
    %cst = arith.constant 1.000000e+00 : f32
    %5 = vector.broadcast %cst : f32 to vector<1x256xf32>
    %6 = arith.addf %4, %5 : vector<1x256xf32>
    %cst_3 = arith.constant 5.000000e-01 : f32
    %7 = vector.broadcast %cst_3 : f32 to vector<1x256xf32>
    %8 = arith.mulf %6, %7 : vector<1x256xf32>
    %cst_4 = arith.constant 0.000000e+00 : f32
    %cst_5 = arith.constant 1.000000e+00 : f32
    %9 = vector.broadcast %cst_4 : f32 to vector<1x256xf32>
    %10 = arith.maximumf %9, %8 : vector<1x256xf32>
    %11 = vector.broadcast %cst_5 : f32 to vector<1x256xf32>
    %12 = arith.minimumf %11, %10 : vector<1x256xf32>
    %cst_6 = arith.constant 2.550000e+02 : f32
    %13 = vector.broadcast %cst_6 : f32 to vector<1x256xf32>
    %14 = arith.mulf %12, %13 : vector<1x256xf32>
    %c0_7 = arith.constant 0 : index
    %c0_8 = arith.constant 0 : index
    %c0_9 = arith.constant 0 : index
    %15 = vector.load %arg3[%c0_7, %c0_8, %c0_9] : memref<1x1x256xf32, #tpu.memory_space<vmem>>, vector<1x1x256xf32>
    %16 = vector.shape_cast %15 : vector<1x1x256xf32> to vector<1x256xf32>
    %cst_10 = arith.constant 1.000000e+00 : f32
    %17 = vector.broadcast %cst_10 : f32 to vector<1x256xf32>
    %18 = arith.addf %16, %17 : vector<1x256xf32>
    %cst_11 = arith.constant 5.000000e-01 : f32
    %19 = vector.broadcast %cst_11 : f32 to vector<1x256xf32>
    %20 = arith.mulf %18, %19 : vector<1x256xf32>
    %cst_12 = arith.constant 0.000000e+00 : f32
    %cst_13 = arith.constant 1.000000e+00 : f32
    %21 = vector.broadcast %cst_12 : f32 to vector<1x256xf32>
    %22 = arith.maximumf %21, %20 : vector<1x256xf32>
    %23 = vector.broadcast %cst_13 : f32 to vector<1x256xf32>
    %24 = arith.minimumf %23, %22 : vector<1x256xf32>
    %cst_14 = arith.constant 2.550000e+02 : f32
    %25 = vector.broadcast %cst_14 : f32 to vector<1x256xf32>
    %26 = arith.mulf %24, %25 : vector<1x256xf32>
    %c0_15 = arith.constant 0 : index
    %c0_16 = arith.constant 0 : index
    %27 = vector.load %arg4[%c0_15, %c0_16] : memref<256x4xf32, #tpu.memory_space<vmem>>, vector<256x4xf32>
    %c0_17 = arith.constant 0 : index
    %c0_18 = arith.constant 0 : index
    %28 = vector.load %arg5[%c0_17, %c0_18] : memref<256x4xf32, #tpu.memory_space<vmem>>, vector<256x4xf32>
    %29 = tpu.iota {dimensions = array<i32: 0>} : vector<256x1xi32>
    %30 = math.floor %14 : vector<1x256xf32>
    %31 = arith.fptosi %30 : vector<1x256xf32> to vector<1x256xi32>
    %32 = math.floor %26 : vector<1x256xf32>
    %33 = arith.fptosi %32 : vector<1x256xf32> to vector<1x256xi32>
    %34 = vector.broadcast %31 : vector<1x256xi32> to vector<256x256xi32>
    %35 = vector.broadcast %29 : vector<256x1xi32> to vector<256x256xi32>
    %36 = arith.cmpi eq, %34, %35 : vector<256x256xi32>
    %37 = vector.broadcast %33 : vector<1x256xi32> to vector<256x256xi32>
    %38 = vector.broadcast %29 : vector<256x1xi32> to vector<256x256xi32>
    %39 = arith.cmpi eq, %37, %38 : vector<256x256xi32>
    %40 = arith.truncf %27 : vector<256x4xf32> to vector<256x4xbf16>
    %41 = arith.truncf %28 : vector<256x4xf32> to vector<256x4xbf16>
    %c0_19 = arith.constant 0 : index
    %c0_20 = arith.constant 0 : index
    %c0_21 = arith.constant 0 : index
    %42 = vector.load %arg6[%c0_19, %c0_20, %c0_21] : memref<3x256x4xf32, #tpu.memory_space<vmem>>, vector<1x256x4xf32>
    %43 = vector.shape_cast %42 : vector<1x256x4xf32> to vector<256x4xf32>
    %44 = arith.extui %36 : vector<256x256xi1> to vector<256x256xi32>
    %45 = arith.sitofp %44 : vector<256x256xi32> to vector<256x256xf32>
    %46 = arith.truncf %45 : vector<256x256xf32> to vector<256x256xbf16>
    %cst_22 = arith.constant dense<0.000000e+00> : vector<256x4xf32>
    %47 = tpu.matmul %46, %40, %cst_22 {dimension_numbers = #tpu.dot_dimension_numbers<[1], [0], [0], [1], [0, 0, 1, 1], [], []>} : vector<256x256xbf16>, vector<256x4xbf16>, vector<256x4xf32> -> vector<256x4xf32>
    %48 = arith.addf %43, %47 : vector<256x4xf32>
    %c0_23 = arith.constant 0 : index
    %c0_24 = arith.constant 0 : index
    %c0_25 = arith.constant 0 : index
    %49 = vector.load %arg6[%c0_23, %c0_24, %c0_25] : memref<3x256x4xf32, #tpu.memory_space<vmem>>, vector<1x256x4xf32>
    %50 = vector.shape_cast %49 : vector<1x256x4xf32> to vector<256x4xf32>
    %51 = vector.shape_cast %48 : vector<256x4xf32> to vector<1x256x4xf32>
    tpu.vector_store %arg6[%c0_23, %c0_24, %c0_25], %51 {strides = array<i32>} : memref<3x256x4xf32, #tpu.memory_space<vmem>>, vector<1x256x4xf32>,
    %c1 = arith.constant 1 : index
    %c0_26 = arith.constant 0 : index
    %c0_27 = arith.constant 0 : index
    %52 = vector.load %arg6[%c1, %c0_26, %c0_27] : memref<3x256x4xf32, #tpu.memory_space<vmem>>, vector<1x256x4xf32>
    %53 = vector.shape_cast %52 : vector<1x256x4xf32> to vector<256x4xf32>
    %54 = arith.extui %39 : vector<256x256xi1> to vector<256x256xi32>
    %55 = arith.sitofp %54 : vector<256x256xi32> to vector<256x256xf32>
    %56 = arith.truncf %55 : vector<256x256xf32> to vector<256x256xbf16>
    %cst_28 = arith.constant dense<0.000000e+00> : vector<256x4xf32>
    %57 = tpu.matmul %56, %41, %cst_28 {dimension_numbers = #tpu.dot_dimension_numbers<[1], [0], [0], [1], [0, 0, 1, 1], [], []>} : vector<256x256xbf16>, vector<256x4xbf16>, vector<256x4xf32> -> vector<256x4xf32>
    %58 = arith.addf %53, %57 : vector<256x4xf32>
    %c1_29 = arith.constant 1 : index
    %c0_30 = arith.constant 0 : index
    %c0_31 = arith.constant 0 : index
    %59 = vector.load %arg6[%c1_29, %c0_30, %c0_31] : memref<3x256x4xf32, #tpu.memory_space<vmem>>, vector<1x256x4xf32>
    %60 = vector.shape_cast %59 : vector<1x256x4xf32> to vector<256x4xf32>
    %61 = vector.shape_cast %58 : vector<256x4xf32> to vector<1x256x4xf32>
    tpu.vector_store %arg6[%c1_29, %c0_30, %c0_31], %61 {strides = array<i32>} : memref<3x256x4xf32, #tpu.memory_space<vmem>>, vector<1x256x4xf32>,
    %c2 = arith.constant 2 : index
    %c0_32 = arith.constant 0 : index
    %c0_33 = arith.constant 0 : index
    %62 = vector.load %arg6[%c2, %c0_32, %c0_33] : memref<3x256x4xf32, #tpu.memory_space<vmem>>, vector<1x256x4xf32>
    %63 = vector.shape_cast %62 : vector<1x256x4xf32> to vector<256x4xf32>
    %cst_34 = arith.constant 0.000000e+00 : f32
    %64 = vector.shape_cast %14 : vector<1x256xf32> to vector<1x256xf32>
    %65 = vector.broadcast %64 : vector<1x256xf32> to vector<256x256xf32>
    %66 = vector.broadcast %cst_34 : f32 to vector<256x256xf32>
    %67 = arith.select %36, %65, %66 : vector<256x256xi1>, vector<256x256xf32>
    %cst_35 = arith.constant dense<0.000000e+00> : vector<256x4xf32>
    %68 = tpu.matmul %67, %27, %cst_35 {dimension_numbers = #tpu.dot_dimension_numbers<[1], [0], [0], [1], [0, 0, 1, 1], [], []>} : vector<256x256xf32>, vector<256x4xf32>, vector<256x4xf32> -> vector<256x4xf32>
    %69 = arith.addf %63, %68 : vector<256x4xf32>
    %c2_36 = arith.constant 2 : index
    %c0_37 = arith.constant 0 : index
    %c0_38 = arith.constant 0 : index
    %70 = vector.load %arg6[%c2_36, %c0_37, %c0_38] : memref<3x256x4xf32, #tpu.memory_space<vmem>>, vector<1x256x4xf32>
    %71 = vector.shape_cast %70 : vector<1x256x4xf32> to vector<256x4xf32>
    %72 = vector.shape_cast %69 : vector<256x4xf32> to vector<1x256x4xf32>
    tpu.vector_store %arg6[%c2_36, %c0_37, %c0_38], %72 {strides = array<i32>} : memref<3x256x4xf32, #tpu.memory_space<vmem>>, vector<1x256x4xf32>,
    return
  }
  func.func @transform_0(%arg0: i32, %arg1: i32) -> (i32, i32, i32) {
    %c0_i32 = arith.constant 0 : i32
    %c0_i32_0 = arith.constant 0 : i32
    return %arg0, %c0_i32, %arg1 : i32, i32, i32
  }
  func.func @transform_1(%arg0: i32, %arg1: i32) -> (i32, i32, i32) {
    %c0_i32 = arith.constant 0 : i32
    %c0_i32_0 = arith.constant 0 : i32
    return %arg0, %c0_i32, %arg1 : i32, i32, i32
  }
  func.func @transform_2(%arg0: i32, %arg1: i32) -> (i32, i32) {
    %c0_i32 = arith.constant 0 : i32
    %c0_i32_0 = arith.constant 0 : i32
    return %arg1, %c0_i32 : i32, i32
  }
  func.func @transform_3(%arg0: i32, %arg1: i32) -> (i32, i32) {
    %c0_i32 = arith.constant 0 : i32
    %c0_i32_0 = arith.constant 0 : i32
    return %arg1, %c0_i32 : i32, i32
  }
  func.func @transform_4(%arg0: i32, %arg1: i32) -> (i32, i32, i32) {
    %c0_i32 = arith.constant 0 : i32
    %c0_i32_0 = arith.constant 0 : i32
    %c0_i32_1 = arith.constant 0 : i32
    return %arg0, %c0_i32, %c0_i32_0 : i32, i32, i32
  }
}

</mosaic_0001>

<llo_original>
// kernel: tpu_custom_call.1
$region0: #{tpu_custom_call.1}
  #allocation0 [shape = 'u32[]', space=smem, size = 0x4, offset = 0x4, fixed_abs, tag = 'smem constant byte address 0x4 - core index']
  #allocation1 [shape = 'u32[144,128]{1,0:T(1,128)}', space=vmem, size = 0x12000, scoped, tag = 'internal scratch']
  %s0 = inlined_call_operand.hbm [shape: f32[3,1,1024], index: 0, kind: input, shape index: {}]
  %s1 = inlined_call_operand.hbm [shape: f32[3,1,1024], index: 1, kind: input, shape index: {}]
  %s2 = inlined_call_operand.vmem [shape: f32[1024,4], index: 2, kind: input, shape index: {}]
  %s3 = inlined_call_operand.vmem [shape: f32[1024,4], index: 3, kind: input, shape index: {}]
  %s4 = inlined_call_operand.vmem [shape: f32[9,256,4], index: 4, kind: output, shape index: {}]
  %s5 = sld [smem:[#allocation0]]
  $region61: #{tpu_custom_call.1} parent=0
    _
  %s7 = ssub.s32 1, %s5
  %s8 = scalar_select 0, %s7, %s5
  $region1: #{tpu_custom_call.1} parent=0
    #allocation2 [shape = 'u8[2048]{0}', space=vmem, size = 0x800, scoped, tag = 'input window, operand 0']
    #allocation3 [shape = 's32[2]{0}', space=sflag, size = 0x8, scoped, tag = 'scoped memory for tpu_custom_call.1']
    #allocation4 [shape = 'u8[2048]{0}', space=vmem, size = 0x800, scoped, tag = 'input window, operand 1']
    #allocation5 [shape = 's32[2]{0}', space=sflag, size = 0x8, scoped, tag = 'scoped memory for tpu_custom_call.1']
    %9 = vsyncpa [#allocation3], 0
    %s10 = scalar_lea.sflag [#allocation3], 1
    %11 = vsyncpa %s10, 0
    %12 = vsyncpa [#allocation5], 0
    %s13 = scalar_lea.sflag [#allocation5], 1
    %14 = vsyncpa %s13, 0
    loop: start=0, step=1, limit=14
    $region2: #{tpu_custom_call.1} parent=1 // loop_pre_header
      _
    $region3: #{tpu_custom_call.1} parent=1 // loop_header
      %s16 = sphi 0, %s20
      %p17 = scmp.ge.s32.totalorder %s16, 14
      %s23 = sphi 0, %s35
      %s24 = sphi 0, %s31
      %s25 = sphi 0, %s23
      %s26 = sphi 0, %s24
      %s27 = sphi 0, %s25
      %s28 = sphi 0, %s26
      %s40 = sphi 0, %s42
      %s43 = sphi 0, %s40
      %s44 = sphi 0, %s43
      %s60 = sphi 0, %s44
      %s68 = sphi 0, %s70
      %s71 = sphi 0, %s68
      %s72 = sphi 0, %s71
      %s88 = sphi 0, %s72
      %s94 = sphi 0, %s96
      %s97 = sphi 0, %s94
      %s98 = sphi 0, %s97
      %s114 = sphi 0, %s98
      %s120 = sphi 0, %s122
      %s123 = sphi 0, %s120
      %s124 = sphi 0, %s123
      %s140 = sphi 0, %s124
      %s146 = sphi 0, %s148
      %s149 = sphi 0, %s146
      %s150 = sphi 0, %s149
      %s166 = sphi 0, %s150
    $region4: #{tpu_custom_call.1} parent=1 // loop_header_branch
      %19 = sbr.rel (%p17) target = $region8
    $region5: #{tpu_custom_call.1} parent=1 // loop_body
      %s21 = ssub.s32 %s16, 1
      %s22 = ssub.s32 %s16, 2
      %s29 = sadd.s32 1, %s24
      %p30 = scmp.ge.s32.totalorder %s29, 4
      %s31 = scalar_select %p30, 0, %s29
      %s32 = sadd.s32 1, %s23
      %s33 = scalar_select %p30, %s32, %s23
      %p34 = scmp.ge.s32.totalorder %s33, 3
      %s35 = scalar_select %p34, 0, %s33
      %s36 = ssub.s32 %s23, %s35
      %s37 = ssub.s32 %s24, %s31
      %s38 = sor.u32 %s36, %s37
      %p39 = scmp.eq.s32.totalorder %s38, 0
      %s41 = sadd.s32 %s40, 1
      %s42 = scalar_select %p39, %s40, %s41
      %p45 = pneg %p39
      %p46 = scmp.eq.s32.totalorder %s16, 11
      %p47 = por %p45, %p46
      %p48 = scmp.ne.s32.totalorder %s40, %s43
      %p49 = scmp.eq.s32.totalorder %s16, 0
      %p50 = por %p48, %p49
      %p51 = scmp.ne.s32.totalorder %s40, %s43
      %p52 = scmp.eq.s32.totalorder %s21, 11
      %p53 = por %p51, %p52
      %p54 = scmp.ne.s32.totalorder %s43, %s44
      %p55 = scmp.eq.s32.totalorder %s21, 0
      %p56 = por %p54, %p55
      %p57 = scmp.ne.s32.totalorder %s43, %s44
      %p58 = scmp.eq.s32.totalorder %s22, 11
      %p59 = por %p57, %p58
      %p61 = scmp.ne.s32.totalorder %s44, %s60
      %p62 = scmp.eq.s32.totalorder %s22, 0
      %p63 = por %p61, %p62
      %s64 = ssub.s32 %s23, %s35
      %s65 = ssub.s32 %s24, %s31
      %s66 = sor.u32 %s64, %s65
      %p67 = scmp.eq.s32.totalorder %s66, 0
      %s69 = sadd.s32 %s68, 1
      %s70 = scalar_select %p67, %s68, %s69
      %p73 = pneg %p67
      %p74 = scmp.eq.s32.totalorder %s16, 11
      %p75 = por %p73, %p74
      %p76 = scmp.ne.s32.totalorder %s68, %s71
      %p77 = scmp.eq.s32.totalorder %s16, 0
      %p78 = por %p76, %p77
      %p79 = scmp.ne.s32.totalorder %s68, %s71
      %p80 = scmp.eq.s32.totalorder %s21, 11
      %p81 = por %p79, %p80
      %p82 = scmp.ne.s32.totalorder %s71, %s72
      %p83 = scmp.eq.s32.totalorder %s21, 0
      %p84 = por %p82, %p83
      %p85 = scmp.ne.s32.totalorder %s71, %s72
      %p86 = scmp.eq.s32.totalorder %s22, 11
      %p87 = por %p85, %p86
      %p89 = scmp.ne.s32.totalorder %s72, %s88
      %p90 = scmp.eq.s32.totalorder %s22, 0
      %p91 = por %p89, %p90
      %s92 = ssub.s32 %s24, %s31
      %p93 = scmp.eq.s32.totalorder %s92, 0
      %s95 = sadd.s32 %s94, 1
      %s96 = scalar_select %p93, %s94, %s95
      %p99 = pneg %p93
      %p100 = scmp.eq.s32.totalorder %s16, 11
      %p101 = por %p99, %p100
      %p102 = scmp.ne.s32.totalorder %s94, %s97
      %p103 = scmp.eq.s32.totalorder %s16, 0
      %p104 = por %p102, %p103
      %p105 = scmp.ne.s32.totalorder %s94, %s97
      %p106 = scmp.eq.s32.totalorder %s21, 11
      %p107 = por %p105, %p106
      %p108 = scmp.ne.s32.totalorder %s97, %s98
      %p109 = scmp.eq.s32.totalorder %s21, 0
      %p110 = por %p108, %p109
      %p111 = scmp.ne.s32.totalorder %s97, %s98
      %p112 = scmp.eq.s32.totalorder %s22, 11
      %p113 = por %p111, %p112
      %p115 = scmp.ne.s32.totalorder %s98, %s114
      %p116 = scmp.eq.s32.totalorder %s22, 0
      %p117 = por %p115, %p116
      %s118 = ssub.s32 %s24, %s31
      %p119 = scmp.eq.s32.totalorder %s118, 0
      %s121 = sadd.s32 %s120, 1
      %s122 = scalar_select %p119, %s120, %s121
      %p125 = pneg %p119
      %p126 = scmp.eq.s32.totalorder %s16, 11
      %p127 = por %p125, %p126
      %p128 = scmp.ne.s32.totalorder %s120, %s123
      %p129 = scmp.eq.s32.totalorder %s16, 0
      %p130 = por %p128, %p129
      %p131 = scmp.ne.s32.totalorder %s120, %s123
      %p132 = scmp.eq.s32.totalorder %s21, 11
      %p133 = por %p131, %p132
      %p134 = scmp.ne.s32.totalorder %s123, %s124
      %p135 = scmp.eq.s32.totalorder %s21, 0
      %p136 = por %p134, %p135
      %p137 = scmp.ne.s32.totalorder %s123, %s124
      %p138 = scmp.eq.s32.totalorder %s22, 11
      %p139 = por %p137, %p138
      %p141 = scmp.ne.s32.totalorder %s124, %s140
      %p142 = scmp.eq.s32.totalorder %s22, 0
      %p143 = por %p141, %p142
      %s144 = ssub.s32 %s23, %s35
      %p145 = scmp.eq.s32.totalorder %s144, 0
      %s147 = sadd.s32 %s146, 1
      %s148 = scalar_select %p145, %s146, %s147
      %p151 = pneg %p145
      %p152 = scmp.eq.s32.totalorder %s16, 11
      %p153 = por %p151, %p152
      %p154 = scmp.ne.s32.totalorder %s146, %s149
      %p155 = scmp.eq.s32.totalorder %s16, 0
      %p156 = por %p154, %p155
      %p157 = scmp.ne.s32.totalorder %s146, %s149
      %p158 = scmp.eq.s32.totalorder %s21, 11
      %p159 = por %p157, %p158
      %p160 = scmp.ne.s32.totalorder %s149, %s150
      %p161 = scmp.eq.s32.totalorder %s21, 0
      %p162 = por %p160, %p161
      %p163 = scmp.ne.s32.totalorder %s149, %s150
      %p164 = scmp.eq.s32.totalorder %s22, 11
      %p165 = por %p163, %p164
      %p167 = scmp.ne.s32.totalorder %s150, %s166
      %p168 = scmp.eq.s32.totalorder %s22, 0
      %p169 = por %p167, %p168
      %p170 = scmp.le.s32.totalorder 1, %s16
      %p171 = scmp.lt.s32.totalorder %s16, 13
      %p172 = pnand %p170, %p171
      %p173 = pneg %p172
      // Predicated region
      $region9: #{tpu_custom_call.1} parent=5 // pred_check
        _
      $region10: #{tpu_custom_call.1} parent=5 // pred_check_branch
        %175 = sbr.rel (%p172) target = $region12
      $region11: #{tpu_custom_call.1} parent=5 // pred_region
        %s176 = ssub.s32 %s16, 1
      $region12: #{tpu_custom_call.1} parent=5 // pred_fallthru
        _
      %p177 = scmp.lt.s32.totalorder %s16, 12
      // Predicated region
      $region13: #{tpu_custom_call.1} parent=5 // pred_check
        %p178 = pneg %p177
      $region14: #{tpu_custom_call.1} parent=5 // pred_check_branch
        %180 = sbr.rel (%p178) target = $region16
      $region15: #{tpu_custom_call.1} parent=5 // pred_region
        // Predicated region
        $region17: #{tpu_custom_call.1} parent=15 // pred_check
          %p181 = pneg %p50
        $region18: #{tpu_custom_call.1} parent=15 // pred_check_branch
          %183 = sbr.rel (%p181) target = $region20
        $region19: #{tpu_custom_call.1} parent=15 // pred_region
          %s184 = sand.u32 %s40, 1
          %s185 = scalar_lea.sflag [#allocation3], %s184
          %s186 = sand.u32 %s40, 1
          %s187 = smul.addr %s186, 2
          %s188 = scalar_lea.vmem [#allocation2], %s187
          %s189 = smul.u32 2, %s24
          %s191 = ssub.s32 32, 32
          %192 = vsyncadd %s185, %s191
          %s193 = smul.addr %s23, 8
          %s194 = sadd.s32 %s189, %s193
          %s195 = smul.addr %s194, 16
          %s196 = scalar_lea.hbm %s0, %s195
          %s198 = sshll.u32 %s188, 4
          %s199 = int_to_ptr.vmem [resolvable:$true] %s198
          %201 = dma.hbm_to_vmem [thread:$0]  %s196, 32, %s199, %s185
        $region20: #{tpu_custom_call.1} parent=15 // pred_fallthru
          _
        // Predicated region
        $region21: #{tpu_custom_call.1} parent=15 // pred_check
          %p202 = pneg %p78
        $region22: #{tpu_custom_call.1} parent=15 // pred_check_branch
          %204 = sbr.rel (%p202) target = $region24
        $region23: #{tpu_custom_call.1} parent=15 // pred_region
          %s205 = sand.u32 %s68, 1
          %s206 = scalar_lea.sflag [#allocation5], %s205
          %s207 = sand.u32 %s68, 1
          %s208 = smul.addr %s207, 2
          %s209 = scalar_lea.vmem [#allocation4], %s208
          %s210 = smul.u32 2, %s24
          %s212 = ssub.s32 32, 32
          %213 = vsyncadd %s206, %s212
          %s214 = smul.addr %s23, 8
          %s215 = sadd.s32 %s210, %s214
          %s216 = smul.addr %s215, 16
          %s217 = scalar_lea.hbm %s1, %s216
          %s219 = sshll.u32 %s209, 4
          %s220 = int_to_ptr.vmem [resolvable:$true] %s219
          %222 = dma.hbm_to_vmem [thread:$0]  %s217, 32, %s220, %s206
        $region24: #{tpu_custom_call.1} parent=15 // pred_fallthru
          _
        // Predicated region
        $region25: #{tpu_custom_call.1} parent=15 // pred_check
          %p223 = pneg %p104
        $region26: #{tpu_custom_call.1} parent=15 // pred_check_branch
          %225 = sbr.rel (%p223) target = $region28
        $region27: #{tpu_custom_call.1} parent=15 // pred_region
          %s226 = smul.u32 32, %s24
          %p227 = scmp.lt.s32.totalorder %s226, 127
          %s228 = scalar_select %p227, %s226, 127
          %s229 = smul.addr %s228, 8
          %s230 = scalar_lea.vmem %s2, %s229
          %s231 = smul.u32 32, %s24
        $region28: #{tpu_custom_call.1} parent=15 // pred_fallthru
          _
        // Predicated region
        $region29: #{tpu_custom_call.1} parent=15 // pred_check
          %p232 = pneg %p130
        $region30: #{tpu_custom_call.1} parent=15 // pred_check_branch
          %234 = sbr.rel (%p232) target = $region32
        $region31: #{tpu_custom_call.1} parent=15 // pred_region
          %s235 = smul.u32 32, %s24
          %p236 = scmp.lt.s32.totalorder %s235, 127
          %s237 = scalar_select %p236, %s235, 127
          %s238 = smul.addr %s237, 8
          %s239 = scalar_lea.vmem %s3, %s238
          %s240 = smul.u32 32, %s24
        $region32: #{tpu_custom_call.1} parent=15 // pred_fallthru
          _
      $region16: #{tpu_custom_call.1} parent=5 // pred_fallthru
        _
      %p241 = scmp.le.s32.totalorder 1, %s16
      %p242 = scmp.lt.s32.totalorder %s16, 13
      %p243 = pnand %p241, %p242
      %p244 = pneg %p243
      // Predicated region
      $region33: #{tpu_custom_call.1} parent=5 // pred_check
        _
      $region34: #{tpu_custom_call.1} parent=5 // pred_check_branch
        %246 = sbr.rel (%p243) target = $region36
      $region35: #{tpu_custom_call.1} parent=5 // pred_region
        %s247 = ssub.s32 %s16, 1
        %s248 = sand.u32 %s43, 1
        %s249 = scalar_lea.sflag [#allocation3], %s248
        %s250 = sand.u32 %s43, 1
        %s251 = smul.addr %s250, 2
        %s252 = scalar_lea.vmem [#allocation2], %s251
        // Predicated region
        $region37: #{tpu_custom_call.1} parent=35 // pred_check
          %p253 = pneg %p56
        $region38: #{tpu_custom_call.1} parent=35 // pred_check_branch
          %255 = sbr.rel (%p253) target = $region40
        $region39: #{tpu_custom_call.1} parent=35 // pred_region
          %256 = dma.done %s249, 32
        $region40: #{tpu_custom_call.1} parent=35 // pred_fallthru
          _
        %s257 = sand.u32 %s71, 1
        %s258 = scalar_lea.sflag [#allocation5], %s257
        %s259 = sand.u32 %s71, 1
        %s260 = smul.addr %s259, 2
        %s261 = scalar_lea.vmem [#allocation4], %s260
        // Predicated region
        $region41: #{tpu_custom_call.1} parent=35 // pred_check
          %p262 = pneg %p84
        $region42: #{tpu_custom_call.1} parent=35 // pred_check_branch
          %264 = sbr.rel (%p262) target = $region44
        $region43: #{tpu_custom_call.1} parent=35 // pred_region
          %265 = dma.done %s258, 32
        $region44: #{tpu_custom_call.1} parent=35 // pred_fallthru
          _
        %s266 = sand.u32 %s43, 1
        %s267 = scalar_lea.sflag [#allocation3], %s266
        %s268 = sand.u32 %s43, 1
        %s269 = smul.addr %s268, 2
        %s270 = scalar_lea.vmem [#allocation2], %s269
        %p271 = pneg %p56
        %p272 = pneg %p53
        %s273 = sand.u32 %s71, 1
        %s274 = scalar_lea.sflag [#allocation5], %s273
        %s275 = sand.u32 %s71, 1
        %s276 = smul.addr %s275, 2
        %s277 = scalar_lea.vmem [#allocation4], %s276
        %p278 = pneg %p84
        %p279 = pneg %p81
        %s280 = smul.u32 32, %s26
        %p281 = scmp.lt.s32.totalorder %s280, 127
        %s282 = scalar_select %p281, %s280, 127
        %s283 = smul.addr %s282, 8
        %s284 = scalar_lea.vmem %s2, %s283
        %p285 = pneg %p110
        %p286 = pneg %p107
        %s287 = smul.u32 32, %s26
        %p288 = scmp.lt.s32.totalorder %s287, 127
        %s289 = scalar_select %p288, %s287, 127
        %s290 = smul.addr %s289, 8
        %s291 = scalar_lea.vmem %s3, %s290
        %p292 = pneg %p136
        %p293 = pneg %p133
        %p294 = pneg %p162
        %p295 = pneg %p159
        %s296 = smul.u32 3, %s25
        %p297 = scmp.lt.s32.totalorder %s296, 8
        %s298 = scalar_select %p297, %s296, 8
        %s299 = smul.addr %s298, 32
        %s300 = smul.addr %s299, 8
        %s301 = scalar_lea.vmem %s4, %s300
        %s302 = smul.u32 2, %s26
        %s303 = smul.u32 2, %s26
        %s304 = smul.u32 32, %s26
        %p305 = scmp.lt.s32.totalorder %s304, 127
        %s306 = scalar_select %p305, %s304, 127
        %s307 = smul.addr %s306, 8
        %s308 = scalar_lea.vmem %s2, %s307
        %s309 = smul.u32 32, %s26
        %s310 = smul.u32 32, %s26
        %p311 = scmp.lt.s32.totalorder %s310, 127
        %s312 = scalar_select %p311, %s310, 127
        %s313 = smul.addr %s312, 8
        %s314 = scalar_lea.vmem %s3, %s313
        %s315 = smul.u32 32, %s26
        %s316 = smul.u32 3, %s25
        %p317 = scmp.lt.s32.totalorder %s316, 8
        %s318 = scalar_select %p317, %s316, 8
        %s319 = smul.addr %s318, 32
        %s320 = smul.addr %s319, 8
        %s321 = scalar_lea.vmem %s4, %s320
        %s322 = smul.u32 3, %s25
        %p324 = scmp.eq.s32.totalorder %s26, 0
        // Predicated region
        $region45: #{tpu_custom_call.1} parent=35 // pred_check
          %p325 = pneg %p324
        $region46: #{tpu_custom_call.1} parent=35 // pred_check_branch
          %327 = sbr.rel (%p325) target = $region48
        $region47: #{tpu_custom_call.1} parent=35 // pred_region
          %vm328 = vcmask 31744
          %329 = vst.msk [vmem:[%s321] sm:$0xff] %vm328, 0.0
          %330 = vst.msk [vmem:[%s321 + $0x8] sm:$0xff] %vm328, 0.0
          %331 = vst.msk [vmem:[%s321 + $0x10] sm:$0xff] %vm328, 0.0
          %332 = vst.msk [vmem:[%s321 + $0x18] sm:$0xff] %vm328, 0.0
          %333 = vst.msk [vmem:[%s321 + $0x20] sm:$0xff] %vm328, 0.0
          %334 = vst.msk [vmem:[%s321 + $0x28] sm:$0xff] %vm328, 0.0
          %335 = vst.msk [vmem:[%s321 + $0x30] sm:$0xff] %vm328, 0.0
          %336 = vst.msk [vmem:[%s321 + $0x38] sm:$0xff] %vm328, 0.0
          %337 = vst.msk [vmem:[%s321 + $0x40] sm:$0xff] %vm328, 0.0
          %338 = vst.msk [vmem:[%s321 + $0x48] sm:$0xff] %vm328, 0.0
          %339 = vst.msk [vmem:[%s321 + $0x50] sm:$0xff] %vm328, 0.0
          %340 = vst.msk [vmem:[%s321 + $0x58] sm:$0xff] %vm328, 0.0
          %341 = vst.msk [vmem:[%s321 + $0x60] sm:$0xff] %vm328, 0.0
          %342 = vst.msk [vmem:[%s321 + $0x68] sm:$0xff] %vm328, 0.0
          %343 = vst.msk [vmem:[%s321 + $0x70] sm:$0xff] %vm328, 0.0
          %344 = vst.msk [vmem:[%s321 + $0x78] sm:$0xff] %vm328, 0.0
          %345 = vst.msk [vmem:[%s321 + $0x80] sm:$0xff] %vm328, 0.0
          %346 = vst.msk [vmem:[%s321 + $0x88] sm:$0xff] %vm328, 0.0
          %347 = vst.msk [vmem:[%s321 + $0x90] sm:$0xff] %vm328, 0.0
          %348 = vst.msk [vmem:[%s321 + $0x98] sm:$0xff] %vm328, 0.0
          %349 = vst.msk [vmem:[%s321 + $0xa0] sm:$0xff] %vm328, 0.0
          %350 = vst.msk [vmem:[%s321 + $0xa8] sm:$0xff] %vm328, 0.0
          %351 = vst.msk [vmem:[%s321 + $0xb0] sm:$0xff] %vm328, 0.0
          %352 = vst.msk [vmem:[%s321 + $0xb8] sm:$0xff] %vm328, 0.0
          %353 = vst.msk [vmem:[%s321 + $0xc0] sm:$0xff] %vm328, 0.0
          %354 = vst.msk [vmem:[%s321 + $0xc8] sm:$0xff] %vm328, 0.0
          %355 = vst.msk [vmem:[%s321 + $0xd0] sm:$0xff] %vm328, 0.0
          %356 = vst.msk [vmem:[%s321 + $0xd8] sm:$0xff] %vm328, 0.0
          %357 = vst.msk [vmem:[%s321 + $0xe0] sm:$0xff] %vm328, 0.0
          %358 = vst.msk [vmem:[%s321 + $0xe8] sm:$0xff] %vm328, 0.0
          %359 = vst.msk [vmem:[%s321 + $0xf0] sm:$0xff] %vm328, 0.0
          %360 = vst.msk [vmem:[%s321 + $0xf8] sm:$0xff] %vm328, 0.0
          %361 = vst.msk [vmem:[%s321 + $0x100] sm:$0xff] %vm328, 0.0
          %362 = vst.msk [vmem:[%s321 + $0x108] sm:$0xff] %vm328, 0.0
          %363 = vst.msk [vmem:[%s321 + $0x110] sm:$0xff] %vm328, 0.0
          %364 = vst.msk [vmem:[%s321 + $0x118] sm:$0xff] %vm328, 0.0
          %365 = vst.msk [vmem:[%s321 + $0x120] sm:$0xff] %vm328, 0.0
          %366 = vst.msk [vmem:[%s321 + $0x128] sm:$0xff] %vm328, 0.0
          %367 = vst.msk [vmem:[%s321 + $0x130] sm:$0xff] %vm328, 0.0
          %368 = vst.msk [vmem:[%s321 + $0x138] sm:$0xff] %vm328, 0.0
          %369 = vst.msk [vmem:[%s321 + $0x140] sm:$0xff] %vm328, 0.0
          %370 = vst.msk [vmem:[%s321 + $0x148] sm:$0xff] %vm328, 0.0
          %371 = vst.msk [vmem:[%s321 + $0x150] sm:$0xff] %vm328, 0.0
          %372 = vst.msk [vmem:[%s321 + $0x158] sm:$0xff] %vm328, 0.0
          %373 = vst.msk [vmem:[%s321 + $0x160] sm:$0xff] %vm328, 0.0
          %374 = vst.msk [vmem:[%s321 + $0x168] sm:$0xff] %vm328, 0.0
          %375 = vst.msk [vmem:[%s321 + $0x170] sm:$0xff] %vm328, 0.0
          %376 = vst.msk [vmem:[%s321 + $0x178] sm:$0xff] %vm328, 0.0
          %377 = vst.msk [vmem:[%s321 + $0x180] sm:$0xff] %vm328, 0.0
          %378 = vst.msk [vmem:[%s321 + $0x188] sm:$0xff] %vm328, 0.0
          %379 = vst.msk [vmem:[%s321 + $0x190] sm:$0xff] %vm328, 0.0
          %380 = vst.msk [vmem:[%s321 + $0x198] sm:$0xff] %vm328, 0.0
          %381 = vst.msk [vmem:[%s321 + $0x1a0] sm:$0xff] %vm328, 0.0
          %382 = vst.msk [vmem:[%s321 + $0x1a8] sm:$0xff] %vm328, 0.0
          %383 = vst.msk [vmem:[%s321 + $0x1b0] sm:$0xff] %vm328, 0.0
          %384 = vst.msk [vmem:[%s321 + $0x1b8] sm:$0xff] %vm328, 0.0
          %385 = vst.msk [vmem:[%s321 + $0x1c0] sm:$0xff] %vm328, 0.0
          %386 = vst.msk [vmem:[%s321 + $0x1c8] sm:$0xff] %vm328, 0.0
          %387 = vst.msk [vmem:[%s321 + $0x1d0] sm:$0xff] %vm328, 0.0
          %388 = vst.msk [vmem:[%s321 + $0x1d8] sm:$0xff] %vm328, 0.0
          %389 = vst.msk [vmem:[%s321 + $0x1e0] sm:$0xff] %vm328, 0.0
          %390 = vst.msk [vmem:[%s321 + $0x1e8] sm:$0xff] %vm328, 0.0
          %391 = vst.msk [vmem:[%s321 + $0x1f0] sm:$0xff] %vm328, 0.0
          %392 = vst.msk [vmem:[%s321 + $0x1f8] sm:$0xff] %vm328, 0.0
          %393 = vst.msk [vmem:[%s321 + $0x200] sm:$0xff] %vm328, 0.0
          %394 = vst.msk [vmem:[%s321 + $0x208] sm:$0xff] %vm328, 0.0
          %395 = vst.msk [vmem:[%s321 + $0x210] sm:$0xff] %vm328, 0.0
          %396 = vst.msk [vmem:[%s321 + $0x218] sm:$0xff] %vm328, 0.0
          %397 = vst.msk [vmem:[%s321 + $0x220] sm:$0xff] %vm328, 0.0
          %398 = vst.msk [vmem:[%s321 + $0x228] sm:$0xff] %vm328, 0.0
          %399 = vst.msk [vmem:[%s321 + $0x230] sm:$0xff] %vm328, 0.0
          %400 = vst.msk [vmem:[%s321 + $0x238] sm:$0xff] %vm328, 0.0
          %401 = vst.msk [vmem:[%s321 + $0x240] sm:$0xff] %vm328, 0.0
          %402 = vst.msk [vmem:[%s321 + $0x248] sm:$0xff] %vm328, 0.0
          %403 = vst.msk [vmem:[%s321 + $0x250] sm:$0xff] %vm328, 0.0
          %404 = vst.msk [vmem:[%s321 + $0x258] sm:$0xff] %vm328, 0.0
          %405 = vst.msk [vmem:[%s321 + $0x260] sm:$0xff] %vm328, 0.0
          %406 = vst.msk [vmem:[%s321 + $0x268] sm:$0xff] %vm328, 0.0
          %407 = vst.msk [vmem:[%s321 + $0x270] sm:$0xff] %vm328, 0.0
          %408 = vst.msk [vmem:[%s321 + $0x278] sm:$0xff] %vm328, 0.0
          %409 = vst.msk [vmem:[%s321 + $0x280] sm:$0xff] %vm328, 0.0
          %410 = vst.msk [vmem:[%s321 + $0x288] sm:$0xff] %vm328, 0.0
          %411 = vst.msk [vmem:[%s321 + $0x290] sm:$0xff] %vm328, 0.0
          %412 = vst.msk [vmem:[%s321 + $0x298] sm:$0xff] %vm328, 0.0
          %413 = vst.msk [vmem:[%s321 + $0x2a0] sm:$0xff] %vm328, 0.0
          %414 = vst.msk [vmem:[%s321 + $0x2a8] sm:$0xff] %vm328, 0.0
          %415 = vst.msk [vmem:[%s321 + $0x2b0] sm:$0xff] %vm328, 0.0
          %416 = vst.msk [vmem:[%s321 + $0x2b8] sm:$0xff] %vm328, 0.0
          %417 = vst.msk [vmem:[%s321 + $0x2c0] sm:$0xff] %vm328, 0.0
          %418 = vst.msk [vmem:[%s321 + $0x2c8] sm:$0xff] %vm328, 0.0
          %419 = vst.msk [vmem:[%s321 + $0x2d0] sm:$0xff] %vm328, 0.0
          %420 = vst.msk [vmem:[%s321 + $0x2d8] sm:$0xff] %vm328, 0.0
          %421 = vst.msk [vmem:[%s321 + $0x2e0] sm:$0xff] %vm328, 0.0
          %422 = vst.msk [vmem:[%s321 + $0x2e8] sm:$0xff] %vm328, 0.0
          %423 = vst.msk [vmem:[%s321 + $0x2f0] sm:$0xff] %vm328, 0.0
          %424 = vst.msk [vmem:[%s321 + $0x2f8] sm:$0xff] %vm328, 0.0
        $region48: #{tpu_custom_call.1} parent=35 // pred_fallthru
          _
        %v425 = vld [vmem:[%s252] sm:$0x3]
        %v426 = vadd.f32 %v425, 1.0
        %v427 = vmul.f32 %v426, 0.5
        %v428 = vmax.f32 %v427, 0.0
        %v429 = vmin.f32 %v428, 1.0
        %v430 = vmul.f32 %v429, 255.0
        %v431 = vld [vmem:[%s261] sm:$0x3]
        %v432 = vadd.f32 %v431, 1.0
        %v433 = vmul.f32 %v432, 0.5
        %v434 = vmax.f32 %v433, 0.0
        %v435 = vmin.f32 %v434, 1.0
        %v436 = vmul.f32 %v435, 255.0
        %v437 = vld [vmem:[%s308] sm:$0xff]
        %v438 = vld [vmem:[%s308 + $0x8] sm:$0xff]
        %v439 = vld [vmem:[%s308 + $0x10] sm:$0xff]
        %v440 = vld [vmem:[%s308 + $0x18] sm:$0xff]
        %v441 = vld [vmem:[%s308 + $0x20] sm:$0xff]
        %v442 = vld [vmem:[%s308 + $0x28] sm:$0xff]
        %v443 = vld [vmem:[%s308 + $0x30] sm:$0xff]
        %v444 = vld [vmem:[%s308 + $0x38] sm:$0xff]
        %v445 = vld [vmem:[%s308 + $0x40] sm:$0xff]
        %v446 = vld [vmem:[%s308 + $0x48] sm:$0xff]
        %v447 = vld [vmem:[%s308 + $0x50] sm:$0xff]
        %v448 = vld [vmem:[%s308 + $0x58] sm:$0xff]
        %v449 = vld [vmem:[%s308 + $0x60] sm:$0xff]
        %v450 = vld [vmem:[%s308 + $0x68] sm:$0xff]
        %v451 = vld [vmem:[%s308 + $0x70] sm:$0xff]
        %v452 = vld [vmem:[%s308 + $0x78] sm:$0xff]
        %v453 = vld [vmem:[%s308 + $0x80] sm:$0xff]
        %v454 = vld [vmem:[%s308 + $0x88] sm:$0xff]
        %v455 = vld [vmem:[%s308 + $0x90] sm:$0xff]
        %v456 = vld [vmem:[%s308 + $0x98] sm:$0xff]
        %v457 = vld [vmem:[%s308 + $0xa0] sm:$0xff]
        %v458 = vld [vmem:[%s308 + $0xa8] sm:$0xff]
        %v459 = vld [vmem:[%s308 + $0xb0] sm:$0xff]
        %v460 = vld [vmem:[%s308 + $0xb8] sm:$0xff]
        %v461 = vld [vmem:[%s308 + $0xc0] sm:$0xff]
        %v462 = vld [vmem:[%s308 + $0xc8] sm:$0xff]
        %v463 = vld [vmem:[%s308 + $0xd0] sm:$0xff]
        %v464 = vld [vmem:[%s308 + $0xd8] sm:$0xff]
        %v465 = vld [vmem:[%s308 + $0xe0] sm:$0xff]
        %v466 = vld [vmem:[%s308 + $0xe8] sm:$0xff]
        %v467 = vld [vmem:[%s308 + $0xf0] sm:$0xff]
        %v468 = vld [vmem:[%s308 + $0xf8] sm:$0xff]
        %v469 = vld [vmem:[%s314] sm:$0xff]
        %v470 = vld [vmem:[%s314 + $0x8] sm:$0xff]
        %v471 = vld [vmem:[%s314 + $0x10] sm:$0xff]
        %v472 = vld [vmem:[%s314 + $0x18] sm:$0xff]
        %v473 = vld [vmem:[%s314 + $0x20] sm:$0xff]
        %v474 = vld [vmem:[%s314 + $0x28] sm:$0xff]
        %v475 = vld [vmem:[%s314 + $0x30] sm:$0xff]
        %v476 = vld [vmem:[%s314 + $0x38] sm:$0xff]
        %v477 = vld [vmem:[%s314 + $0x40] sm:$0xff]
        %v478 = vld [vmem:[%s314 + $0x48] sm:$0xff]
        %v479 = vld [vmem:[%s314 + $0x50] sm:$0xff]
        %v480 = vld [vmem:[%s314 + $0x58] sm:$0xff]
        %v481 = vld [vmem:[%s314 + $0x60] sm:$0xff]
        %v482 = vld [vmem:[%s314 + $0x68] sm:$0xff]
        %v483 = vld [vmem:[%s314 + $0x70] sm:$0xff]
        %v484 = vld [vmem:[%s314 + $0x78] sm:$0xff]
        %v485 = vld [vmem:[%s314 + $0x80] sm:$0xff]
        %v486 = vld [vmem:[%s314 + $0x88] sm:$0xff]
        %v487 = vld [vmem:[%s314 + $0x90] sm:$0xff]
        %v488 = vld [vmem:[%s314 + $0x98] sm:$0xff]
        %v489 = vld [vmem:[%s314 + $0xa0] sm:$0xff]
        %v490 = vld [vmem:[%s314 + $0xa8] sm:$0xff]
        %v491 = vld [vmem:[%s314 + $0xb0] sm:$0xff]
        %v492 = vld [vmem:[%s314 + $0xb8] sm:$0xff]
        %v493 = vld [vmem:[%s314 + $0xc0] sm:$0xff]
        %v494 = vld [vmem:[%s314 + $0xc8] sm:$0xff]
        %v495 = vld [vmem:[%s314 + $0xd0] sm:$0xff]
        %v496 = vld [vmem:[%s314 + $0xd8] sm:$0xff]
        %v497 = vld [vmem:[%s314 + $0xe0] sm:$0xff]
        %v498 = vld [vmem:[%s314 + $0xe8] sm:$0xff]
        %v499 = vld [vmem:[%s314 + $0xf0] sm:$0xff]
        %v500 = vld [vmem:[%s314 + $0xf8] sm:$0xff]
        %v501 = vlaneseq
        %v502 = vshrl.u32 %v501, 7
        %v503 = vadd.s32 %v502, 8
        %v504 = vadd.s32 %v502, 16
        %v505 = vadd.s32 %v502, 24
        %v506 = vadd.s32 %v502, 32
        %v507 = vadd.s32 %v502, 40
        %v508 = vadd.s32 %v502, 48
        %v509 = vadd.s32 %v502, 56
        %v510 = vadd.s32 %v502, 64
        %v511 = vadd.s32 %v502, 72
        %v512 = vadd.s32 %v502, 80
        %v513 = vadd.s32 %v502, 88
        %v514 = vadd.s32 %v502, 96
        %v515 = vadd.s32 %v502, 104
        %v516 = vadd.s32 %v502, 112
        %v517 = vadd.s32 %v502, 120
        %v518 = vadd.s32 %v502, 128
        %v519 = vadd.s32 %v502, 136
        %v520 = vadd.s32 %v502, 144
        %v521 = vadd.s32 %v502, 152
        %v522 = vadd.s32 %v502, 160
        %v523 = vadd.s32 %v502, 168
        %v524 = vadd.s32 %v502, 176
        %v525 = vadd.s32 %v502, 184
        %v526 = vadd.s32 %v502, 192
        %v527 = vadd.s32 %v502, 200
        %v528 = vadd.s32 %v502, 208
        %v529 = vadd.s32 %v502, 216
        %v530 = vadd.s32 %v502, 224
        %v531 = vadd.s32 %v502, 232
        %v532 = vadd.s32 %v502, 240
        %v533 = vadd.s32 %v502, 248
        %v534 = vfloor.f32 %v430
        %v535 = vcvt.f32.s32.to.zero.pseudo %v534
        %v536 = vfloor.f32 %v436
        %v537 = vcvt.f32.s32.to.zero.pseudo %v536
        %v538 = vlaneseq
        %v539 = vshrl.u32 %v538, 7
        %v540 = vsub.s32 0, %v539
        %v541 = vrot.slane %v535, %v540
        %v542 = vlaneseq
        %v543 = vshrl.u32 %v542, 7
        %v544 = vsub.s32 1, %v543
        %v545 = vrot.slane %v535, %v544
        %vm546 = vcmp.eq.s32.totalorder %v541, %v502
        %vm547 = vcmp.eq.s32.totalorder %v545, %v502
        %vm548 = vcmp.eq.s32.totalorder %v541, %v503
        %vm549 = vcmp.eq.s32.totalorder %v545, %v503
        %vm550 = vcmp.eq.s32.totalorder %v541, %v504
        %vm551 = vcmp.eq.s32.totalorder %v545, %v504
        %vm552 = vcmp.eq.s32.totalorder %v541, %v505
        %vm553 = vcmp.eq.s32.totalorder %v545, %v505
        %vm554 = vcmp.eq.s32.totalorder %v541, %v506
        %vm555 = vcmp.eq.s32.totalorder %v545, %v506
        %vm556 = vcmp.eq.s32.totalorder %v541, %v507
        %vm557 = vcmp.eq.s32.totalorder %v545, %v507
        %vm558 = vcmp.eq.s32.totalorder %v541, %v508
        %vm559 = vcmp.eq.s32.totalorder %v545, %v508
        %vm560 = vcmp.eq.s32.totalorder %v541, %v509
        %vm561 = vcmp.eq.s32.totalorder %v545, %v509
        %vm562 = vcmp.eq.s32.totalorder %v541, %v510
        %vm563 = vcmp.eq.s32.totalorder %v545, %v510
        %vm564 = vcmp.eq.s32.totalorder %v541, %v511
        %vm565 = vcmp.eq.s32.totalorder %v545, %v511
        %vm566 = vcmp.eq.s32.totalorder %v541, %v512
        %vm567 = vcmp.eq.s32.totalorder %v545, %v512
        %vm568 = vcmp.eq.s32.totalorder %v541, %v513
        %vm569 = vcmp.eq.s32.totalorder %v545, %v513
        %vm570 = vcmp.eq.s32.totalorder %v541, %v514
        %vm571 = vcmp.eq.s32.totalorder %v545, %v514
        %vm572 = vcmp.eq.s32.totalorder %v541, %v515
        %vm573 = vcmp.eq.s32.totalorder %v545, %v515
        %vm574 = vcmp.eq.s32.totalorder %v541, %v516
        %vm575 = vcmp.eq.s32.totalorder %v545, %v516
        %vm576 = vcmp.eq.s32.totalorder %v541, %v517
        %vm577 = vcmp.eq.s32.totalorder %v545, %v517
        %vm578 = vcmp.eq.s32.totalorder %v541, %v518
        %vm579 = vcmp.eq.s32.totalorder %v545, %v518
        %vm580 = vcmp.eq.s32.totalorder %v541, %v519
        %vm581 = vcmp.eq.s32.totalorder %v545, %v519
        %vm582 = vcmp.eq.s32.totalorder %v541, %v520
        %vm583 = vcmp.eq.s32.totalorder %v545, %v520
        %vm584 = vcmp.eq.s32.totalorder %v541, %v521
        %vm585 = vcmp.eq.s32.totalorder %v545, %v521
        %vm586 = vcmp.eq.s32.totalorder %v541, %v522
        %vm587 = vcmp.eq.s32.totalorder %v545, %v522
        %vm588 = vcmp.eq.s32.totalorder %v541, %v523
        %vm589 = vcmp.eq.s32.totalorder %v545, %v523
        %vm590 = vcmp.eq.s32.totalorder %v541, %v524
        %vm591 = vcmp.eq.s32.totalorder %v545, %v524
        %vm592 = vcmp.eq.s32.totalorder %v541, %v525
        %vm593 = vcmp.eq.s32.totalorder %v545, %v525
        %vm594 = vcmp.eq.s32.totalorder %v541, %v526
        %vm595 = vcmp.eq.s32.totalorder %v545, %v526
        %vm596 = vcmp.eq.s32.totalorder %v541, %v527
        %vm597 = vcmp.eq.s32.totalorder %v545, %v527
        %vm598 = vcmp.eq.s32.totalorder %v541, %v528
        %vm599 = vcmp.eq.s32.totalorder %v545, %v528
        %vm600 = vcmp.eq.s32.totalorder %v541, %v529
        %vm601 = vcmp.eq.s32.totalorder %v545, %v529
        %vm602 = vcmp.eq.s32.totalorder %v541, %v530
        %vm603 = vcmp.eq.s32.totalorder %v545, %v530
        %vm604 = vcmp.eq.s32.totalorder %v541, %v531
        %vm605 = vcmp.eq.s32.totalorder %v545, %v531
        %vm606 = vcmp.eq.s32.totalorder %v541, %v532
        %vm607 = vcmp.eq.s32.totalorder %v545, %v532
        %vm608 = vcmp.eq.s32.totalorder %v541, %v533
        %vm609 = vcmp.eq.s32.totalorder %v545, %v533
        %v610 = vlaneseq
        %v611 = vshrl.u32 %v610, 7
        %v612 = vsub.s32 0, %v611
        %v613 = vrot.slane %v537, %v612
        %v614 = vlaneseq
        %v615 = vshrl.u32 %v614, 7
        %v616 = vsub.s32 1, %v615
        %v617 = vrot.slane %v537, %v616
        %vm618 = vcmp.eq.s32.totalorder %v613, %v502
        %vm619 = vcmp.eq.s32.totalorder %v617, %v502
        %vm620 = vcmp.eq.s32.totalorder %v613, %v503
        %vm621 = vcmp.eq.s32.totalorder %v617, %v503
        %vm622 = vcmp.eq.s32.totalorder %v613, %v504
        %vm623 = vcmp.eq.s32.totalorder %v617, %v504
        %vm624 = vcmp.eq.s32.totalorder %v613, %v505
        %vm625 = vcmp.eq.s32.totalorder %v617, %v505
        %vm626 = vcmp.eq.s32.totalorder %v613, %v506
        %vm627 = vcmp.eq.s32.totalorder %v617, %v506
        %vm628 = vcmp.eq.s32.totalorder %v613, %v507
        %vm629 = vcmp.eq.s32.totalorder %v617, %v507
        %vm630 = vcmp.eq.s32.totalorder %v613, %v508
        %vm631 = vcmp.eq.s32.totalorder %v617, %v508
        %vm632 = vcmp.eq.s32.totalorder %v613, %v509
        %vm633 = vcmp.eq.s32.totalorder %v617, %v509
        %vm634 = vcmp.eq.s32.totalorder %v613, %v510
        %vm635 = vcmp.eq.s32.totalorder %v617, %v510
        %vm636 = vcmp.eq.s32.totalorder %v613, %v511
        %vm637 = vcmp.eq.s32.totalorder %v617, %v511
        %vm638 = vcmp.eq.s32.totalorder %v613, %v512
        %vm639 = vcmp.eq.s32.totalorder %v617, %v512
        %vm640 = vcmp.eq.s32.totalorder %v613, %v513
        %vm641 = vcmp.eq.s32.totalorder %v617, %v513
        %vm642 = vcmp.eq.s32.totalorder %v613, %v514
        %vm643 = vcmp.eq.s32.totalorder %v617, %v514
        %vm644 = vcmp.eq.s32.totalorder %v613, %v515
        %vm645 = vcmp.eq.s32.totalorder %v617, %v515
        %vm646 = vcmp.eq.s32.totalorder %v613, %v516
        %vm647 = vcmp.eq.s32.totalorder %v617, %v516
        %vm648 = vcmp.eq.s32.totalorder %v613, %v517
        %vm649 = vcmp.eq.s32.totalorder %v617, %v517
        %vm650 = vcmp.eq.s32.totalorder %v613, %v518
        %vm651 = vcmp.eq.s32.totalorder %v617, %v518
        %vm652 = vcmp.eq.s32.totalorder %v613, %v519
        %vm653 = vcmp.eq.s32.totalorder %v617, %v519
        %vm654 = vcmp.eq.s32.totalorder %v613, %v520
        %vm655 = vcmp.eq.s32.totalorder %v617, %v520
        %vm656 = vcmp.eq.s32.totalorder %v613, %v521
        %vm657 = vcmp.eq.s32.totalorder %v617, %v521
        %vm658 = vcmp.eq.s32.totalorder %v613, %v522
        %vm659 = vcmp.eq.s32.totalorder %v617, %v522
        %vm660 = vcmp.eq.s32.totalorder %v613, %v523
        %vm661 = vcmp.eq.s32.totalorder %v617, %v523
        %vm662 = vcmp.eq.s32.totalorder %v613, %v524
        %vm663 = vcmp.eq.s32.totalorder %v617, %v524
        %vm664 = vcmp.eq.s32.totalorder %v613, %v525
        %vm665 = vcmp.eq.s32.totalorder %v617, %v525
        %vm666 = vcmp.eq.s32.totalorder %v613, %v526
        %vm667 = vcmp.eq.s32.totalorder %v617, %v526
        %vm668 = vcmp.eq.s32.totalorder %v613, %v527
        %vm669 = vcmp.eq.s32.totalorder %v617, %v527
        %vm670 = vcmp.eq.s32.totalorder %v613, %v528
        %vm671 = vcmp.eq.s32.totalorder %v617, %v528
        %vm672 = vcmp.eq.s32.totalorder %v613, %v529
        %vm673 = vcmp.eq.s32.totalorder %v617, %v529
        %vm674 = vcmp.eq.s32.totalorder %v613, %v530
        %vm675 = vcmp.eq.s32.totalorder %v617, %v530
        %vm676 = vcmp.eq.s32.totalorder %v613, %v531
        %vm677 = vcmp.eq.s32.totalorder %v617, %v531
        %vm678 = vcmp.eq.s32.totalorder %v613, %v532
        %vm679 = vcmp.eq.s32.totalorder %v617, %v532
        %vm680 = vcmp.eq.s32.totalorder %v613, %v533
        %vm681 = vcmp.eq.s32.totalorder %v617, %v533
        %v682 = vpack.c.bf16 %v438, %v437
        %v683 = vpack.c.bf16 %v440, %v439
        %v684 = vpack.c.bf16 %v442, %v441
        %v685 = vpack.c.bf16 %v444, %v443
        %v686 = vpack.c.bf16 %v446, %v445
        %v687 = vpack.c.bf16 %v448, %v447
        %v688 = vpack.c.bf16 %v450, %v449
        %v689 = vpack.c.bf16 %v452, %v451
        %v690 = vpack.c.bf16 %v454, %v453
        %v691 = vpack.c.bf16 %v456, %v455
        %v692 = vpack.c.bf16 %v458, %v457
        %v693 = vpack.c.bf16 %v460, %v459
        %v694 = vpack.c.bf16 %v462, %v461
        %v695 = vpack.c.bf16 %v464, %v463
        %v696 = vpack.c.bf16 %v466, %v465
        %v697 = vpack.c.bf16 %v468, %v467
        %v698 = vpack.c.bf16 %v470, %v469
        %v699 = vpack.c.bf16 %v472, %v471
        %v700 = vpack.c.bf16 %v474, %v473
        %v701 = vpack.c.bf16 %v476, %v475
        %v702 = vpack.c.bf16 %v478, %v477
        %v703 = vpack.c.bf16 %v480, %v479
        %v704 = vpack.c.bf16 %v482, %v481
        %v705 = vpack.c.bf16 %v484, %v483
        %v706 = vpack.c.bf16 %v486, %v485
        %v707 = vpack.c.bf16 %v488, %v487
        %v708 = vpack.c.bf16 %v490, %v489
        %v709 = vpack.c.bf16 %v492, %v491
        %v710 = vpack.c.bf16 %v494, %v493
        %v711 = vpack.c.bf16 %v496, %v495
        %v712 = vpack.c.bf16 %v498, %v497
        %v713 = vpack.c.bf16 %v500, %v499
        %v714 = vld [vmem:[%s321] sm:$0xff]
        %v715 = vld [vmem:[%s321 + $0x8] sm:$0xff]
        %v716 = vld [vmem:[%s321 + $0x10] sm:$0xff]
        %v717 = vld [vmem:[%s321 + $0x18] sm:$0xff]
        %v718 = vld [vmem:[%s321 + $0x20] sm:$0xff]
        %v719 = vld [vmem:[%s321 + $0x28] sm:$0xff]
        %v720 = vld [vmem:[%s321 + $0x30] sm:$0xff]
        %v721 = vld [vmem:[%s321 + $0x38] sm:$0xff]
        %v722 = vld [vmem:[%s321 + $0x40] sm:$0xff]
        %v723 = vld [vmem:[%s321 + $0x48] sm:$0xff]
        %v724 = vld [vmem:[%s321 + $0x50] sm:$0xff]
        %v725 = vld [vmem:[%s321 + $0x58] sm:$0xff]
        %v726 = vld [vmem:[%s321 + $0x60] sm:$0xff]
        %v727 = vld [vmem:[%s321 + $0x68] sm:$0xff]
        %v728 = vld [vmem:[%s321 + $0x70] sm:$0xff]
        %v729 = vld [vmem:[%s321 + $0x78] sm:$0xff]
        %v730 = vld [vmem:[%s321 + $0x80] sm:$0xff]
        %v731 = vld [vmem:[%s321 + $0x88] sm:$0xff]
        %v732 = vld [vmem:[%s321 + $0x90] sm:$0xff]
        %v733 = vld [vmem:[%s321 + $0x98] sm:$0xff]
        %v734 = vld [vmem:[%s321 + $0xa0] sm:$0xff]
        %v735 = vld [vmem:[%s321 + $0xa8] sm:$0xff]
        %v736 = vld [vmem:[%s321 + $0xb0] sm:$0xff]
        %v737 = vld [vmem:[%s321 + $0xb8] sm:$0xff]
        %v738 = vld [vmem:[%s321 + $0xc0] sm:$0xff]
        %v739 = vld [vmem:[%s321 + $0xc8] sm:$0xff]
        %v740 = vld [vmem:[%s321 + $0xd0] sm:$0xff]
        %v741 = vld [vmem:[%s321 + $0xd8] sm:$0xff]
        %v742 = vld [vmem:[%s321 + $0xe0] sm:$0xff]
        %v743 = vld [vmem:[%s321 + $0xe8] sm:$0xff]
        %v744 = vld [vmem:[%s321 + $0xf0] sm:$0xff]
        %v745 = vld [vmem:[%s321 + $0xf8] sm:$0xff]
        %v746 = vsel %vm546, 1, 0
        %v747 = vsel %vm547, 1, 0
        %v748 = vsel %vm548, 1, 0
        %v749 = vsel %vm549, 1, 0
        %v750 = vsel %vm550, 1, 0
        %v751 = vsel %vm551, 1, 0
        %v752 = vsel %vm552, 1, 0
        %v753 = vsel %vm553, 1, 0
        %v754 = vsel %vm554, 1, 0
        %v755 = vsel %vm555, 1, 0
        %v756 = vsel %vm556, 1, 0
        %v757 = vsel %vm557, 1, 0
        %v758 = vsel %vm558, 1, 0
        %v759 = vsel %vm559, 1, 0
        %v760 = vsel %vm560, 1, 0
        %v761 = vsel %vm561, 1, 0
        %v762 = vsel %vm562, 1, 0
        %v763 = vsel %vm563, 1, 0
        %v764 = vsel %vm564, 1, 0
        %v765 = vsel %vm565, 1, 0
        %v766 = vsel %vm566, 1, 0
        %v767 = vsel %vm567, 1, 0
        %v768 = vsel %vm568, 1, 0
        %v769 = vsel %vm569, 1, 0
        %v770 = vsel %vm570, 1, 0
        %v771 = vsel %vm571, 1, 0
        %v772 = vsel %vm572, 1, 0
        %v773 = vsel %vm573, 1, 0
        %v774 = vsel %vm574, 1, 0
        %v775 = vsel %vm575, 1, 0
        %v776 = vsel %vm576, 1, 0
        %v777 = vsel %vm577, 1, 0
        %v778 = vsel %vm578, 1, 0
        %v779 = vsel %vm579, 1, 0
        %v780 = vsel %vm580, 1, 0
        %v781 = vsel %vm581, 1, 0
        %v782 = vsel %vm582, 1, 0
        %v783 = vsel %vm583, 1, 0
        %v784 = vsel %vm584, 1, 0
        %v785 = vsel %vm585, 1, 0
        %v786 = vsel %vm586, 1, 0
        %v787 = vsel %vm587, 1, 0
        %v788 = vsel %vm588, 1, 0
        %v789 = vsel %vm589, 1, 0
        %v790 = vsel %vm590, 1, 0
        %v791 = vsel %vm591, 1, 0
        %v792 = vsel %vm592, 1, 0
        %v793 = vsel %vm593, 1, 0
        %v794 = vsel %vm594, 1, 0
        %v795 = vsel %vm595, 1, 0
        %v796 = vsel %vm596, 1, 0
        %v797 = vsel %vm597, 1, 0
        %v798 = vsel %vm598, 1, 0
        %v799 = vsel %vm599, 1, 0
        %v800 = vsel %vm600, 1, 0
        %v801 = vsel %vm601, 1, 0
        %v802 = vsel %vm602, 1, 0
        %v803 = vsel %vm603, 1, 0
        %v804 = vsel %vm604, 1, 0
        %v805 = vsel %vm605, 1, 0
        %v806 = vsel %vm606, 1, 0
        %v807 = vsel %vm607, 1, 0
        %v808 = vsel %vm608, 1, 0
        %v809 = vsel %vm609, 1, 0
        %v810 = vcvt.s32.f32 %v746
        %v811 = vcvt.s32.f32 %v747
        %v812 = vcvt.s32.f32 %v748
        %v813 = vcvt.s32.f32 %v749
        %v814 = vcvt.s32.f32 %v750
        %v815 = vcvt.s32.f32 %v751
        %v816 = vcvt.s32.f32 %v752
        %v817 = vcvt.s32.f32 %v753
        %v818 = vcvt.s32.f32 %v754
        %v819 = vcvt.s32.f32 %v755
        %v820 = vcvt.s32.f32 %v756
        %v821 = vcvt.s32.f32 %v757
        %v822 = vcvt.s32.f32 %v758
        %v823 = vcvt.s32.f32 %v759
        %v824 = vcvt.s32.f32 %v760
        %v825 = vcvt.s32.f32 %v761
        %v826 = vcvt.s32.f32 %v762
        %v827 = vcvt.s32.f32 %v763
        %v828 = vcvt.s32.f32 %v764
        %v829 = vcvt.s32.f32 %v765
        %v830 = vcvt.s32.f32 %v766
        %v831 = vcvt.s32.f32 %v767
        %v832 = vcvt.s32.f32 %v768
        %v833 = vcvt.s32.f32 %v769
        %v834 = vcvt.s32.f32 %v770
        %v835 = vcvt.s32.f32 %v771
        %v836 = vcvt.s32.f32 %v772
        %v837 = vcvt.s32.f32 %v773
        %v838 = vcvt.s32.f32 %v774
        %v839 = vcvt.s32.f32 %v775
        %v840 = vcvt.s32.f32 %v776
        %v841 = vcvt.s32.f32 %v777
        %v842 = vcvt.s32.f32 %v778
        %v843 = vcvt.s32.f32 %v779
        %v844 = vcvt.s32.f32 %v780
        %v845 = vcvt.s32.f32 %v781
        %v846 = vcvt.s32.f32 %v782
        %v847 = vcvt.s32.f32 %v783
        %v848 = vcvt.s32.f32 %v784
        %v849 = vcvt.s32.f32 %v785
        %v850 = vcvt.s32.f32 %v786
        %v851 = vcvt.s32.f32 %v787
        %v852 = vcvt.s32.f32 %v788
        %v853 = vcvt.s32.f32 %v789
        %v854 = vcvt.s32.f32 %v790
        %v855 = vcvt.s32.f32 %v791
        %v856 = vcvt.s32.f32 %v792
        %v857 = vcvt.s32.f32 %v793
        %v858 = vcvt.s32.f32 %v794
        %v859 = vcvt.s32.f32 %v795
        %v860 = vcvt.s32.f32 %v796
        %v861 = vcvt.s32.f32 %v797
        %v862 = vcvt.s32.f32 %v798
        %v863 = vcvt.s32.f32 %v799
        %v864 = vcvt.s32.f32 %v800
        %v865 = vcvt.s32.f32 %v801
        %v866 = vcvt.s32.f32 %v802
        %v867 = vcvt.s32.f32 %v803
        %v868 = vcvt.s32.f32 %v804
        %v869 = vcvt.s32.f32 %v805
        %v870 = vcvt.s32.f32 %v806
        %v871 = vcvt.s32.f32 %v807
        %v872 = vcvt.s32.f32 %v808
        %v873 = vcvt.s32.f32 %v809
        %v874 = vpack.c.bf16 %v812, %v810
        %v875 = vpack.c.bf16 %v813, %v811
        %v876 = vpack.c.bf16 %v816, %v814
        %v877 = vpack.c.bf16 %v817, %v815
        %v878 = vpack.c.bf16 %v820, %v818
        %v879 = vpack.c.bf16 %v821, %v819
        %v880 = vpack.c.bf16 %v824, %v822
        %v881 = vpack.c.bf16 %v825, %v823
        %v882 = vpack.c.bf16 %v828, %v826
        %v883 = vpack.c.bf16 %v829, %v827
        %v884 = vpack.c.bf16 %v832, %v830
        %v885 = vpack.c.bf16 %v833, %v831
        %v886 = vpack.c.bf16 %v836, %v834
        %v887 = vpack.c.bf16 %v837, %v835
        %v888 = vpack.c.bf16 %v840, %v838
        %v889 = vpack.c.bf16 %v841, %v839
        %v890 = vpack.c.bf16 %v844, %v842
        %v891 = vpack.c.bf16 %v845, %v843
        %v892 = vpack.c.bf16 %v848, %v846
        %v893 = vpack.c.bf16 %v849, %v847
        %v894 = vpack.c.bf16 %v852, %v850
        %v895 = vpack.c.bf16 %v853, %v851
        %v896 = vpack.c.bf16 %v856, %v854
        %v897 = vpack.c.bf16 %v857, %v855
        %v898 = vpack.c.bf16 %v860, %v858
        %v899 = vpack.c.bf16 %v861, %v859
        %v900 = vpack.c.bf16 %v864, %v862
        %v901 = vpack.c.bf16 %v865, %v863
        %v902 = vpack.c.bf16 %v868, %v866
        %v903 = vpack.c.bf16 %v869, %v867
        %v904 = vpack.c.bf16 %v872, %v870
        %v905 = vpack.c.bf16 %v873, %v871
        %906 = vmatprep.subr.bf16.mxu0 0
        %907 = vmatpush1.bf16.msra.mxu0 %v682
        %908 = vmatprep.subr.bf16.mxu0 0
        %909 = vmatpush1.bf16.msra.mxu0 %v683
        %910 = vmatprep.subr.bf16.mxu0 0
        %911 = vmatpush1.bf16.msra.mxu0 %v684
        %912 = vmatprep.subr.bf16.mxu0 0
        %913 = vmatpush1.bf16.msra.mxu0 %v685
        %914 = vmatprep.subr.bf16.mxu0 0
        %915 = vmatpush1.bf16.msra.mxu0 %v686
        %916 = vmatprep.subr.bf16.mxu0 0
        %917 = vmatpush1.bf16.msra.mxu0 %v687
        %918 = vmatprep.subr.bf16.mxu0 0
        %919 = vmatpush1.bf16.msra.mxu0 %v688
        %920 = vmatprep.subr.bf16.mxu0 0
        %921 = vmatpush1.bf16.msra.mxu0 %v689
        %922 = vmatprep.subr.bf16.mxu0 0
        %923 = vmatpush1.bf16.msra.mxu0 %v690
        %924 = vmatprep.subr.bf16.mxu0 0
        %925 = vmatpush1.bf16.msra.mxu0 %v691
        %926 = vmatprep.subr.bf16.mxu0 0
        %927 = vmatpush1.bf16.msra.mxu0 %v692
        %928 = vmatprep.subr.bf16.mxu0 0
        %929 = vmatpush1.bf16.msra.mxu0 %v693
        %930 = vmatprep.subr.bf16.mxu0 0
        %931 = vmatpush1.bf16.msra.mxu0 %v694
        %932 = vmatprep.subr.bf16.mxu0 0
        %933 = vmatpush1.bf16.msra.mxu0 %v695
        %934 = vmatprep.subr.bf16.mxu0 0
        %935 = vmatpush1.bf16.msra.mxu0 %v696
        %936 = vmatprep.subr.bf16.mxu0 0
        %937 = vmatpush1.bf16.msra.mxu0 %v697
        %938 = vmatprep.mubr.bf16.mxu0 %v875
        %939 = vmatmul.mubr.bf16.gmra.mrb[0].mxu0 %v874
        %v940 = vpop.f32.mrb[0].mxu0
        %v941 = vadd.f32 0.0, %v940
        %v942 = vpop.f32.mrb[0].mxu0
        %v943 = vpop.f32.mrb[0].mxu0
        %v944 = vadd.f32 0.0, %v943
        %v945 = vpop.f32.mrb[0].mxu0
        %946 = vmatprep.mubr.bf16.mxu0 %v877
        %947 = vmatmul.mubr.bf16.gmra.mrb[0].mxu0 %v876
        %v948 = vpop.f32.mrb[0].mxu0
        %v949 = vadd.f32 0.0, %v948
        %v950 = vpop.f32.mrb[0].mxu0
        %v951 = vpop.f32.mrb[0].mxu0
        %v952 = vadd.f32 0.0, %v951
        %v953 = vpop.f32.mrb[0].mxu0
        %954 = vmatprep.mubr.bf16.mxu0 %v879
        %955 = vmatmul.mubr.bf16.gmra.mrb[0].mxu0 %v878
        %v956 = vpop.f32.mrb[0].mxu0
        %v957 = vadd.f32 0.0, %v956
        %v958 = vpop.f32.mrb[0].mxu0
        %v959 = vpop.f32.mrb[0].mxu0
        %v960 = vadd.f32 0.0, %v959
        %v961 = vpop.f32.mrb[0].mxu0
        %962 = vmatprep.mubr.bf16.mxu0 %v881
        %963 = vmatmul.mubr.bf16.gmra.mrb[0].mxu0 %v880
        %v964 = vpop.f32.mrb[0].mxu0
        %v965 = vadd.f32 0.0, %v964
        %v966 = vpop.f32.mrb[0].mxu0
        %v967 = vpop.f32.mrb[0].mxu0
        %v968 = vadd.f32 0.0, %v967
        %v969 = vpop.f32.mrb[0].mxu0
        %970 = vmatprep.mubr.bf16.mxu0 %v883
        %971 = vmatmul.mubr.bf16.gmra.mrb[0].mxu0 %v882
        %v972 = vpop.f32.mrb[0].mxu0
        %v973 = vadd.f32 0.0, %v972
        %v974 = vpop.f32.mrb[0].mxu0
        %v975 = vpop.f32.mrb[0].mxu0
        %v976 = vadd.f32 0.0, %v975
        %v977 = vpop.f32.mrb[0].mxu0
        %978 = vmatprep.mubr.bf16.mxu0 %v885
        %979 = vmatmul.mubr.bf16.gmra.mrb[0].mxu0 %v884
        %v980 = vpop.f32.mrb[0].mxu0
        %v981 = vadd.f32 0.0, %v980
        %v982 = vpop.f32.mrb[0].mxu0
        %v983 = vpop.f32.mrb[0].mxu0
        %v984 = vadd.f32 0.0, %v983
        %v985 = vpop.f32.mrb[0].mxu0
        %986 = vmatprep.mubr.bf16.mxu0 %v887
        %987 = vmatmul.mubr.bf16.gmra.mrb[0].mxu0 %v886
        %v988 = vpop.f32.mrb[0].mxu0
        %v989 = vadd.f32 0.0, %v988
        %v990 = vpop.f32.mrb[0].mxu0
        %v991 = vpop.f32.mrb[0].mxu0
        %v992 = vadd.f32 0.0, %v991
        %v993 = vpop.f32.mrb[0].mxu0
        %994 = vmatprep.mubr.bf16.mxu0 %v889
        %995 = vmatmul.mubr.bf16.gmra.mrb[0].mxu0 %v888
        %v996 = vpop.f32.mrb[0].mxu0
        %v997 = vadd.f32 0.0, %v996
        %v998 = vpop.f32.mrb[0].mxu0
        %v999 = vpop.f32.mrb[0].mxu0
        %v1000 = vadd.f32 0.0, %v999
        %v1001 = vpop.f32.mrb[0].mxu0
        %1002 = vmatprep.mubr.bf16.mxu0 %v891
        %1003 = vmatmul.mubr.bf16.gmra.mrb[0].mxu0 %v890
        %v1004 = vpop.f32.mrb[0].mxu0
        %v1005 = vadd.f32 0.0, %v1004
        %v1006 = vpop.f32.mrb[0].mxu0
        %v1007 = vpop.f32.mrb[0].mxu0
        %v1008 = vadd.f32 0.0, %v1007
        %v1009 = vpop.f32.mrb[0].mxu0
        %1010 = vmatprep.mubr.bf16.mxu0 %v893
        %1011 = vmatmul.mubr.bf16.gmra.mrb[0].mxu0 %v892
        %v1012 = vpop.f32.mrb[0].mxu0
        %v1013 = vadd.f32 0.0, %v1012
        %v1014 = vpop.f32.mrb[0].mxu0
        %v1015 = vpop.f32.mrb[0].mxu0
        %v1016 = vadd.f32 0.0, %v1015
        %v1017 = vpop.f32.mrb[0].mxu0
        %1018 = vmatprep.mubr.bf16.mxu0 %v895
        %1019 = vmatmul.mubr.bf16.gmra.mrb[0].mxu0 %v894
        %v1020 = vpop.f32.mrb[0].mxu0
        %v1021 = vadd.f32 0.0, %v1020
        %v1022 = vpop.f32.mrb[0].mxu0
        %v1023 = vpop.f32.mrb[0].mxu0
        %v1024 = vadd.f32 0.0, %v1023
        %v1025 = vpop.f32.mrb[0].mxu0
        %1026 = vmatprep.mubr.bf16.mxu0 %v897
        %1027 = vmatmul.mubr.bf16.gmra.mrb[0].mxu0 %v896
        %v1028 = vpop.f32.mrb[0].mxu0
        %v1029 = vadd.f32 0.0, %v1028
        %v1030 = vpop.f32.mrb[0].mxu0
        %v1031 = vpop.f32.mrb[0].mxu0
        %v1032 = vadd.f32 0.0, %v1031
        %v1033 = vpop.f32.mrb[0].mxu0
        %1034 = vmatprep.mubr.bf16.mxu0 %v899
        %1035 = vmatmul.mubr.bf16.gmra.mrb[0].mxu0 %v898
        %v1036 = vpop.f32.mrb[0].mxu0
        %v1037 = vadd.f32 0.0, %v1036
        %v1038 = vpop.f32.mrb[0].mxu0
        %v1039 = vpop.f32.mrb[0].mxu0
        %v1040 = vadd.f32 0.0, %v1039
        %v1041 = vpop.f32.mrb[0].mxu0
        %1042 = vmatprep.mubr.bf16.mxu0 %v901
        %1043 = vmatmul.mubr.bf16.gmra.mrb[0].mxu0 %v900
        %v1044 = vpop.f32.mrb[0].mxu0
        %v1045 = vadd.f32 0.0, %v1044
        %v1046 = vpop.f32.mrb[0].mxu0
        %v1047 = vpop.f32.mrb[0].mxu0
        %v1048 = vadd.f32 0.0, %v1047
        %v1049 = vpop.f32.mrb[0].mxu0
        %1050 = vmatprep.mubr.bf16.mxu0 %v903
        %1051 = vmatmul.mubr.bf16.gmra.mrb[0].mxu0 %v902
        %v1052 = vpop.f32.mrb[0].mxu0
        %v1053 = vadd.f32 0.0, %v1052
        %v1054 = vpop.f32.mrb[0].mxu0
        %v1055 = vpop.f32.mrb[0].mxu0
        %v1056 = vadd.f32 0.0, %v1055
        %v1057 = vpop.f32.mrb[0].mxu0
        %1058 = vmatprep.mubr.bf16.mxu0 %v905
        %1059 = vmatmul.mubr.bf16.gmra.mrb[0].mxu0 %v904
        %v1060 = vpop.f32.mrb[0].mxu0
        %v1061 = vadd.f32 0.0, %v1060
        %v1062 = vpop.f32.mrb[0].mxu0
        %v1063 = vpop.f32.mrb[0].mxu0
        %v1064 = vadd.f32 0.0, %v1063
        %v1065 = vpop.f32.mrb[0].mxu0
        %1066 = vdwg.mxu0
        %v1067 = vadd.f32 %v714, %v941
        %v1068 = vadd.f32 %v715, %v944
        %v1069 = vadd.f32 %v716, %v949
        %v1070 = vadd.f32 %v717, %v952
        %v1071 = vadd.f32 %v718, %v957
        %v1072 = vadd.f32 %v719, %v960
        %v1073 = vadd.f32 %v720, %v965
        %v1074 = vadd.f32 %v721, %v968
        %v1075 = vadd.f32 %v722, %v973
        %v1076 = vadd.f32 %v723, %v976
        %v1077 = vadd.f32 %v724, %v981
        %v1078 = vadd.f32 %v725, %v984
        %v1079 = vadd.f32 %v726, %v989
        %v1080 = vadd.f32 %v727, %v992
        %v1081 = vadd.f32 %v728, %v997
        %v1082 = vadd.f32 %v729, %v1000
        %v1083 = vadd.f32 %v730, %v1005
        %v1084 = vadd.f32 %v731, %v1008
        %v1085 = vadd.f32 %v732, %v1013
        %v1086 = vadd.f32 %v733, %v1016
        %v1087 = vadd.f32 %v734, %v1021
        %v1088 = vadd.f32 %v735, %v1024
        %v1089 = vadd.f32 %v736, %v1029
        %v1090 = vadd.f32 %v737, %v1032
        %v1091 = vadd.f32 %v738, %v1037
        %v1092 = vadd.f32 %v739, %v1040
        %v1093 = vadd.f32 %v740, %v1045
        %v1094 = vadd.f32 %v741, %v1048
        %v1095 = vadd.f32 %v742, %v1053
        %v1096 = vadd.f32 %v743, %v1056
        %v1097 = vadd.f32 %v744, %v1061
        %v1098 = vadd.f32 %v745, %v1064
        %vm1099 = vcmask 31744
        %1100 = vst.msk [vmem:[%s321] sm:$0xff] %vm1099, %v1067
        %1101 = vst.msk [vmem:[%s321 + $0x8] sm:$0xff] %vm1099, %v1068
        %1102 = vst.msk [vmem:[%s321 + $0x10] sm:$0xff] %vm1099, %v1069
        %1103 = vst.msk [vmem:[%s321 + $0x18] sm:$0xff] %vm1099, %v1070
        %1104 = vst.msk [vmem:[%s321 + $0x20] sm:$0xff] %vm1099, %v1071
        %1105 = vst.msk [vmem:[%s321 + $0x28] sm:$0xff] %vm1099, %v1072
        %1106 = vst.msk [vmem:[%s321 + $0x30] sm:$0xff] %vm1099, %v1073
        %1107 = vst.msk [vmem:[%s321 + $0x38] sm:$0xff] %vm1099, %v1074
        %1108 = vst.msk [vmem:[%s321 + $0x40] sm:$0xff] %vm1099, %v1075
        %1109 = vst.msk [vmem:[%s321 + $0x48] sm:$0xff] %vm1099, %v1076
        %1110 = vst.msk [vmem:[%s321 + $0x50] sm:$0xff] %vm1099, %v1077
        %1111 = vst.msk [vmem:[%s321 + $0x58] sm:$0xff] %vm1099, %v1078
        %1112 = vst.msk [vmem:[%s321 + $0x60] sm:$0xff] %vm1099, %v1079
        %1113 = vst.msk [vmem:[%s321 + $0x68] sm:$0xff] %vm1099, %v1080
        %1114 = vst.msk [vmem:[%s321 + $0x70] sm:$0xff] %vm1099, %v1081
        %1115 = vst.msk [vmem:[%s321 + $0x78] sm:$0xff] %vm1099, %v1082
        %1116 = vst.msk [vmem:[%s321 + $0x80] sm:$0xff] %vm1099, %v1083
        %1117 = vst.msk [vmem:[%s321 + $0x88] sm:$0xff] %vm1099, %v1084
        %1118 = vst.msk [vmem:[%s321 + $0x90] sm:$0xff] %vm1099, %v1085
        %1119 = vst.msk [vmem:[%s321 + $0x98] sm:$0xff] %vm1099, %v1086
        %1120 = vst.msk [vmem:[%s321 + $0xa0] sm:$0xff] %vm1099, %v1087
        %1121 = vst.msk [vmem:[%s321 + $0xa8] sm:$0xff] %vm1099, %v1088
        %1122 = vst.msk [vmem:[%s321 + $0xb0] sm:$0xff] %vm1099, %v1089
        %1123 = vst.msk [vmem:[%s321 + $0xb8] sm:$0xff] %vm1099, %v1090
        %1124 = vst.msk [vmem:[%s321 + $0xc0] sm:$0xff] %vm1099, %v1091
        %1125 = vst.msk [vmem:[%s321 + $0xc8] sm:$0xff] %vm1099, %v1092
        %1126 = vst.msk [vmem:[%s321 + $0xd0] sm:$0xff] %vm1099, %v1093
        %1127 = vst.msk [vmem:[%s321 + $0xd8] sm:$0xff] %vm1099, %v1094
        %1128 = vst.msk [vmem:[%s321 + $0xe0] sm:$0xff] %vm1099, %v1095
        %1129 = vst.msk [vmem:[%s321 + $0xe8] sm:$0xff] %vm1099, %v1096
        %1130 = vst.msk [vmem:[%s321 + $0xf0] sm:$0xff] %vm1099, %v1097
        %1131 = vst.msk [vmem:[%s321 + $0xf8] sm:$0xff] %vm1099, %v1098
        %s1132 = scalar_lea.vmem %s321, 256
        %v1133 = vld [vmem:[%s1132] sm:$0xff]
        %v1134 = vld [vmem:[%s1132 + $0x8] sm:$0xff]
        %v1135 = vld [vmem:[%s1132 + $0x10] sm:$0xff]
        %v1136 = vld [vmem:[%s1132 + $0x18] sm:$0xff]
        %v1137 = vld [vmem:[%s1132 + $0x20] sm:$0xff]
        %v1138 = vld [vmem:[%s1132 + $0x28] sm:$0xff]
        %v1139 = vld [vmem:[%s1132 + $0x30] sm:$0xff]
        %v1140 = vld [vmem:[%s1132 + $0x38] sm:$0xff]
        %v1141 = vld [vmem:[%s1132 + $0x40] sm:$0xff]
        %v1142 = vld [vmem:[%s1132 + $0x48] sm:$0xff]
        %v1143 = vld [vmem:[%s1132 + $0x50] sm:$0xff]
        %v1144 = vld [vmem:[%s1132 + $0x58] sm:$0xff]
        %v1145 = vld [vmem:[%s1132 + $0x60] sm:$0xff]
        %v1146 = vld [vmem:[%s1132 + $0x68] sm:$0xff]
        %v1147 = vld [vmem:[%s1132 + $0x70] sm:$0xff]
        %v1148 = vld [vmem:[%s1132 + $0x78] sm:$0xff]
        %v1149 = vld [vmem:[%s1132 + $0x80] sm:$0xff]
        %v1150 = vld [vmem:[%s1132 + $0x88] sm:$0xff]
        %v1151 = vld [vmem:[%s1132 + $0x90] sm:$0xff]
        %v1152 = vld [vmem:[%s1132 + $0x98] sm:$0xff]
        %v1153 = vld [vmem:[%s1132 + $0xa0] sm:$0xff]
        %v1154 = vld [vmem:[%s1132 + $0xa8] sm:$0xff]
        %v1155 = vld [vmem:[%s1132 + $0xb0] sm:$0xff]
        %v1156 = vld [vmem:[%s1132 + $0xb8] sm:$0xff]
        %v1157 = vld [vmem:[%s1132 + $0xc0] sm:$0xff]
        %v1158 = vld [vmem:[%s1132 + $0xc8] sm:$0xff]
        %v1159 = vld [vmem:[%s1132 + $0xd0] sm:$0xff]
        %v1160 = vld [vmem:[%s1132 + $0xd8] sm:$0xff]
        %v1161 = vld [vmem:[%s1132 + $0xe0] sm:$0xff]
        %v1162 = vld [vmem:[%s1132 + $0xe8] sm:$0xff]
        %v1163 = vld [vmem:[%s1132 + $0xf0] sm:$0xff]
        %v1164 = vld [vmem:[%s1132 + $0xf8] sm:$0xff]
        %v1165 = vsel %vm618, 1, 0
        %v1166 = vsel %vm619, 1, 0
        %v1167 = vsel %vm620, 1, 0
        %v1168 = vsel %vm621, 1, 0
        %v1169 = vsel %vm622, 1, 0
        %v1170 = vsel %vm623, 1, 0
        %v1171 = vsel %vm624, 1, 0
        %v1172 = vsel %vm625, 1, 0
        %v1173 = vsel %vm626, 1, 0
        %v1174 = vsel %vm627, 1, 0
        %v1175 = vsel %vm628, 1, 0
        %v1176 = vsel %vm629, 1, 0
        %v1177 = vsel %vm630, 1, 0
        %v1178 = vsel %vm631, 1, 0
        %v1179 = vsel %vm632, 1, 0
        %v1180 = vsel %vm633, 1, 0
        %v1181 = vsel %vm634, 1, 0
        %v1182 = vsel %vm635, 1, 0
        %v1183 = vsel %vm636, 1, 0
        %v1184 = vsel %vm637, 1, 0
        %v1185 = vsel %vm638, 1, 0
        %v1186 = vsel %vm639, 1, 0
        %v1187 = vsel %vm640, 1, 0
        %v1188 = vsel %vm641, 1, 0
        %v1189 = vsel %vm642, 1, 0
        %v1190 = vsel %vm643, 1, 0
        %v1191 = vsel %vm644, 1, 0
        %v1192 = vsel %vm645, 1, 0
        %v1193 = vsel %vm646, 1, 0
        %v1194 = vsel %vm647, 1, 0
        %v1195 = vsel %vm648, 1, 0
        %v1196 = vsel %vm649, 1, 0
        %v1197 = vsel %vm650, 1, 0
        %v1198 = vsel %vm651, 1, 0
        %v1199 = vsel %vm652, 1, 0
        %v1200 = vsel %vm653, 1, 0
        %v1201 = vsel %vm654, 1, 0
        %v1202 = vsel %vm655, 1, 0
        %v1203 = vsel %vm656, 1, 0
        %v1204 = vsel %vm657, 1, 0
        %v1205 = vsel %vm658, 1, 0
        %v1206 = vsel %vm659, 1, 0
        %v1207 = vsel %vm660, 1, 0
        %v1208 = vsel %vm661, 1, 0
        %v1209 = vsel %vm662, 1, 0
        %v1210 = vsel %vm663, 1, 0
        %v1211 = vsel %vm664, 1, 0
        %v1212 = vsel %vm665, 1, 0
        %v1213 = vsel %vm666, 1, 0
        %v1214 = vsel %vm667, 1, 0
        %v1215 = vsel %vm668, 1, 0
        %v1216 = vsel %vm669, 1, 0
        %v1217 = vsel %vm670, 1, 0
        %v1218 = vsel %vm671, 1, 0
        %v1219 = vsel %vm672, 1, 0
        %v1220 = vsel %vm673, 1, 0
        %v1221 = vsel %vm674, 1, 0
        %v1222 = vsel %vm675, 1, 0
        %v1223 = vsel %vm676, 1, 0
        %v1224 = vsel %vm677, 1, 0
        %v1225 = vsel %vm678, 1, 0
        %v1226 = vsel %vm679, 1, 0
        %v1227 = vsel %vm680, 1, 0
        %v1228 = vsel %vm681, 1, 0
        %v1229 = vcvt.s32.f32 %v1165
        %v1230 = vcvt.s32.f32 %v1166
        %v1231 = vcvt.s32.f32 %v1167
        %v1232 = vcvt.s32.f32 %v1168
        %v1233 = vcvt.s32.f32 %v1169
        %v1234 = vcvt.s32.f32 %v1170
        %v1235 = vcvt.s32.f32 %v1171
        %v1236 = vcvt.s32.f32 %v1172
        %v1237 = vcvt.s32.f32 %v1173
        %v1238 = vcvt.s32.f32 %v1174
        %v1239 = vcvt.s32.f32 %v1175
        %v1240 = vcvt.s32.f32 %v1176
        %v1241 = vcvt.s32.f32 %v1177
        %v1242 = vcvt.s32.f32 %v1178
        %v1243 = vcvt.s32.f32 %v1179
        %v1244 = vcvt.s32.f32 %v1180
        %v1245 = vcvt.s32.f32 %v1181
        %v1246 = vcvt.s32.f32 %v1182
        %v1247 = vcvt.s32.f32 %v1183
        %v1248 = vcvt.s32.f32 %v1184
        %v1249 = vcvt.s32.f32 %v1185
        %v1250 = vcvt.s32.f32 %v1186
        %v1251 = vcvt.s32.f32 %v1187
        %v1252 = vcvt.s32.f32 %v1188
        %v1253 = vcvt.s32.f32 %v1189
        %v1254 = vcvt.s32.f32 %v1190
        %v1255 = vcvt.s32.f32 %v1191
        %v1256 = vcvt.s32.f32 %v1192
        %v1257 = vcvt.s32.f32 %v1193
        %v1258 = vcvt.s32.f32 %v1194
        %v1259 = vcvt.s32.f32 %v1195
        %v1260 = vcvt.s32.f32 %v1196
        %v1261 = vcvt.s32.f32 %v1197
        %v1262 = vcvt.s32.f32 %v1198
        %v1263 = vcvt.s32.f32 %v1199
        %v1264 = vcvt.s32.f32 %v1200
        %v1265 = vcvt.s32.f32 %v1201
        %v1266 = vcvt.s32.f32 %v1202
        %v1267 = vcvt.s32.f32 %v1203
        %v1268 = vcvt.s32.f32 %v1204
        %v1269 = vcvt.s32.f32 %v1205
        %v1270 = vcvt.s32.f32 %v1206
        %v1271 = vcvt.s32.f32 %v1207
        %v1272 = vcvt.s32.f32 %v1208
        %v1273 = vcvt.s32.f32 %v1209
        %v1274 = vcvt.s32.f32 %v1210
        %v1275 = vcvt.s32.f32 %v1211
        %v1276 = vcvt.s32.f32 %v1212
        %v1277 = vcvt.s32.f32 %v1213
        %v1278 = vcvt.s32.f32 %v1214
        %v1279 = vcvt.s32.f32 %v1215
        %v1280 = vcvt.s32.f32 %v1216
        %v1281 = vcvt.s32.f32 %v1217
        %v1282 = vcvt.s32.f32 %v1218
        %v1283 = vcvt.s32.f32 %v1219
        %v1284 = vcvt.s32.f32 %v1220
        %v1285 = vcvt.s32.f32 %v1221
        %v1286 = vcvt.s32.f32 %v1222
        %v1287 = vcvt.s32.f32 %v1223
        %v1288 = vcvt.s32.f32 %v1224
        %v1289 = vcvt.s32.f32 %v1225
        %v1290 = vcvt.s32.f32 %v1226
        %v1291 = vcvt.s32.f32 %v1227
        %v1292 = vcvt.s32.f32 %v1228
        %v1293 = vpack.c.bf16 %v1231, %v1229
        %v1294 = vpack.c.bf16 %v1232, %v1230
        %v1295 = vpack.c.bf16 %v1235, %v1233
        %v1296 = vpack.c.bf16 %v1236, %v1234
        %v1297 = vpack.c.bf16 %v1239, %v1237
        %v1298 = vpack.c.bf16 %v1240, %v1238
        %v1299 = vpack.c.bf16 %v1243, %v1241
        %v1300 = vpack.c.bf16 %v1244, %v1242
        %v1301 = vpack.c.bf16 %v1247, %v1245
        %v1302 = vpack.c.bf16 %v1248, %v1246
        %v1303 = vpack.c.bf16 %v1251, %v1249
        %v1304 = vpack.c.bf16 %v1252, %v1250
        %v1305 = vpack.c.bf16 %v1255, %v1253
        %v1306 = vpack.c.bf16 %v1256, %v1254
        %v1307 = vpack.c.bf16 %v1259, %v1257
        %v1308 = vpack.c.bf16 %v1260, %v1258
        %v1309 = vpack.c.bf16 %v1263, %v1261
        %v1310 = vpack.c.bf16 %v1264, %v1262
        %v1311 = vpack.c.bf16 %v1267, %v1265
        %v1312 = vpack.c.bf16 %v1268, %v1266
        %v1313 = vpack.c.bf16 %v1271, %v1269
        %v1314 = vpack.c.bf16 %v1272, %v1270
        %v1315 = vpack.c.bf16 %v1275, %v1273
        %v1316 = vpack.c.bf16 %v1276, %v1274
        %v1317 = vpack.c.bf16 %v1279, %v1277
        %v1318 = vpack.c.bf16 %v1280, %v1278
        %v1319 = vpack.c.bf16 %v1283, %v1281
        %v1320 = vpack.c.bf16 %v1284, %v1282
        %v1321 = vpack.c.bf16 %v1287, %v1285
        %v1322 = vpack.c.bf16 %v1288, %v1286
        %v1323 = vpack.c.bf16 %v1291, %v1289
        %v1324 = vpack.c.bf16 %v1292, %v1290
        %1325 = vmatprep.subr.bf16.mxu0 0
        %1326 = vmatpush1.bf16.msra.mxu0 %v698
        %1327 = vmatprep.subr.bf16.mxu0 0
        %1328 = vmatpush1.bf16.msra.mxu0 %v699
        %1329 = vmatprep.subr.bf16.mxu0 0
        %1330 = vmatpush1.bf16.msra.mxu0 %v700
        %1331 = vmatprep.subr.bf16.mxu0 0
        %1332 = vmatpush1.bf16.msra.mxu0 %v701
        %1333 = vmatprep.subr.bf16.mxu0 0
        %1334 = vmatpush1.bf16.msra.mxu0 %v702
        %1335 = vmatprep.subr.bf16.mxu0 0
        %1336 = vmatpush1.bf16.msra.mxu0 %v703
        %1337 = vmatprep.subr.bf16.mxu0 0
        %1338 = vmatpush1.bf16.msra.mxu0 %v704
        %1339 = vmatprep.subr.bf16.mxu0 0
        %1340 = vmatpush1.bf16.msra.mxu0 %v705
        %1341 = vmatprep.subr.bf16.mxu0 0
        %1342 = vmatpush1.bf16.msra.mxu0 %v706
        %1343 = vmatprep.subr.bf16.mxu0 0
        %1344 = vmatpush1.bf16.msra.mxu0 %v707
        %1345 = vmatprep.subr.bf16.mxu0 0
        %1346 = vmatpush1.bf16.msra.mxu0 %v708
        %1347 = vmatprep.subr.bf16.mxu0 0
        %1348 = vmatpush1.bf16.msra.mxu0 %v709
        %1349 = vmatprep.subr.bf16.mxu0 0
        %1350 = vmatpush1.bf16.msra.mxu0 %v710
        %1351 = vmatprep.subr.bf16.mxu0 0
        %1352 = vmatpush1.bf16.msra.mxu0 %v711
        %1353 = vmatprep.subr.bf16.mxu0 0
        %1354 = vmatpush1.bf16.msra.mxu0 %v712
        %1355 = vmatprep.subr.bf16.mxu0 0
        %1356 = vmatpush1.bf16.msra.mxu0 %v713
        %1357 = vmatprep.mubr.bf16.mxu0 %v1294
        %1358 = vmatmul.mubr.bf16.gmra.mrb[0].mxu0 %v1293
        %v1359 = vpop.f32.mrb[0].mxu0
        %v1360 = vadd.f32 0.0, %v1359
        %v1361 = vpop.f32.mrb[0].mxu0
        %v1362 = vpop.f32.mrb[0].mxu0
        %v1363 = vadd.f32 0.0, %v1362
        %v1364 = vpop.f32.mrb[0].mxu0
        %1365 = vmatprep.mubr.bf16.mxu0 %v1296
        %1366 = vmatmul.mubr.bf16.gmra.mrb[0].mxu0 %v1295
        %v1367 = vpop.f32.mrb[0].mxu0
        %v1368 = vadd.f32 0.0, %v1367
        %v1369 = vpop.f32.mrb[0].mxu0
        %v1370 = vpop.f32.mrb[0].mxu0
        %v1371 = vadd.f32 0.0, %v1370
        %v1372 = vpop.f32.mrb[0].mxu0
        %1373 = vmatprep.mubr.bf16.mxu0 %v1298
        %1374 = vmatmul.mubr.bf16.gmra.mrb[0].mxu0 %v1297
        %v1375 = vpop.f32.mrb[0].mxu0
        %v1376 = vadd.f32 0.0, %v1375
        %v1377 = vpop.f32.mrb[0].mxu0
        %v1378 = vpop.f32.mrb[0].mxu0
        %v1379 = vadd.f32 0.0, %v1378
        %v1380 = vpop.f32.mrb[0].mxu0
        %1381 = vmatprep.mubr.bf16.mxu0 %v1300
        %1382 = vmatmul.mubr.bf16.gmra.mrb[0].mxu0 %v1299
        %v1383 = vpop.f32.mrb[0].mxu0
        %v1384 = vadd.f32 0.0, %v1383
        %v1385 = vpop.f32.mrb[0].mxu0
        %v1386 = vpop.f32.mrb[0].mxu0
        %v1387 = vadd.f32 0.0, %v1386
        %v1388 = vpop.f32.mrb[0].mxu0
        %1389 = vmatprep.mubr.bf16.mxu0 %v1302
        %1390 = vmatmul.mubr.bf16.gmra.mrb[0].mxu0 %v1301
        %v1391 = vpop.f32.mrb[0].mxu0
        %v1392 = vadd.f32 0.0, %v1391
        %v1393 = vpop.f32.mrb[0].mxu0
        %v1394 = vpop.f32.mrb[0].mxu0
        %v1395 = vadd.f32 0.0, %v1394
        %v1396 = vpop.f32.mrb[0].mxu0
        %1397 = vmatprep.mubr.bf16.mxu0 %v1304
        %1398 = vmatmul.mubr.bf16.gmra.mrb[0].mxu0 %v1303
        %v1399 = vpop.f32.mrb[0].mxu0
        %v1400 = vadd.f32 0.0, %v1399
        %v1401 = vpop.f32.mrb[0].mxu0
        %v1402 = vpop.f32.mrb[0].mxu0
        %v1403 = vadd.f32 0.0, %v1402
        %v1404 = vpop.f32.mrb[0].mxu0
        %1405 = vmatprep.mubr.bf16.mxu0 %v1306
        %1406 = vmatmul.mubr.bf16.gmra.mrb[0].mxu0 %v1305
        %v1407 = vpop.f32.mrb[0].mxu0
        %v1408 = vadd.f32 0.0, %v1407
        %v1409 = vpop.f32.mrb[0].mxu0
        %v1410 = vpop.f32.mrb[0].mxu0
        %v1411 = vadd.f32 0.0, %v1410
        %v1412 = vpop.f32.mrb[0].mxu0
        %1413 = vmatprep.mubr.bf16.mxu0 %v1308
        %1414 = vmatmul.mubr.bf16.gmra.mrb[0].mxu0 %v1307
        %v1415 = vpop.f32.mrb[0].mxu0
        %v1416 = vadd.f32 0.0, %v1415
        %v1417 = vpop.f32.mrb[0].mxu0
        %v1418 = vpop.f32.mrb[0].mxu0
        %v1419 = vadd.f32 0.0, %v1418
        %v1420 = vpop.f32.mrb[0].mxu0
        %1421 = vmatprep.mubr.bf16.mxu0 %v1310
        %1422 = vmatmul.mubr.bf16.gmra.mrb[0].mxu0 %v1309
        %v1423 = vpop.f32.mrb[0].mxu0
        %v1424 = vadd.f32 0.0, %v1423
        %v1425 = vpop.f32.mrb[0].mxu0
        %v1426 = vpop.f32.mrb[0].mxu0
        %v1427 = vadd.f32 0.0, %v1426
        %v1428 = vpop.f32.mrb[0].mxu0
        %1429 = vmatprep.mubr.bf16.mxu0 %v1312
        %1430 = vmatmul.mubr.bf16.gmra.mrb[0].mxu0 %v1311
        %v1431 = vpop.f32.mrb[0].mxu0
        %v1432 = vadd.f32 0.0, %v1431
        %v1433 = vpop.f32.mrb[0].mxu0
        %v1434 = vpop.f32.mrb[0].mxu0
        %v1435 = vadd.f32 0.0, %v1434
        %v1436 = vpop.f32.mrb[0].mxu0
        %1437 = vmatprep.mubr.bf16.mxu0 %v1314
        %1438 = vmatmul.mubr.bf16.gmra.mrb[0].mxu0 %v1313
        %v1439 = vpop.f32.mrb[0].mxu0
        %v1440 = vadd.f32 0.0, %v1439
        %v1441 = vpop.f32.mrb[0].mxu0
        %v1442 = vpop.f32.mrb[0].mxu0
        %v1443 = vadd.f32 0.0, %v1442
        %v1444 = vpop.f32.mrb[0].mxu0
        %1445 = vmatprep.mubr.bf16.mxu0 %v1316
        %1446 = vmatmul.mubr.bf16.gmra.mrb[0].mxu0 %v1315
        %v1447 = vpop.f32.mrb[0].mxu0
        %v1448 = vadd.f32 0.0, %v1447
        %v1449 = vpop.f32.mrb[0].mxu0
        %v1450 = vpop.f32.mrb[0].mxu0
        %v1451 = vadd.f32 0.0, %v1450
        %v1452 = vpop.f32.mrb[0].mxu0
        %1453 = vmatprep.mubr.bf16.mxu0 %v1318
        %1454 = vmatmul.mubr.bf16.gmra.mrb[0].mxu0 %v1317
        %v1455 = vpop.f32.mrb[0].mxu0
        %v1456 = vadd.f32 0.0, %v1455
        %v1457 = vpop.f32.mrb[0].mxu0
        %v1458 = vpop.f32.mrb[0].mxu0
        %v1459 = vadd.f32 0.0, %v1458
        %v1460 = vpop.f32.mrb[0].mxu0
        %1461 = vmatprep.mubr.bf16.mxu0 %v1320
        %1462 = vmatmul.mubr.bf16.gmra.mrb[0].mxu0 %v1319
        %v1463 = vpop.f32.mrb[0].mxu0
        %v1464 = vadd.f32 0.0, %v1463
        %v1465 = vpop.f32.mrb[0].mxu0
        %v1466 = vpop.f32.mrb[0].mxu0
        %v1467 = vadd.f32 0.0, %v1466
        %v1468 = vpop.f32.mrb[0].mxu0
        %1469 = vmatprep.mubr.bf16.mxu0 %v1322
        %1470 = vmatmul.mubr.bf16.gmra.mrb[0].mxu0 %v1321
        %v1471 = vpop.f32.mrb[0].mxu0
        %v1472 = vadd.f32 0.0, %v1471
        %v1473 = vpop.f32.mrb[0].mxu0
        %v1474 = vpop.f32.mrb[0].mxu0
        %v1475 = vadd.f32 0.0, %v1474
        %v1476 = vpop.f32.mrb[0].mxu0
        %1477 = vmatprep.mubr.bf16.mxu0 %v1324
        %1478 = vmatmul.mubr.bf16.gmra.mrb[0].mxu0 %v1323
        %v1479 = vpop.f32.mrb[0].mxu0
        %v1480 = vadd.f32 0.0, %v1479
        %v1481 = vpop.f32.mrb[0].mxu0
        %v1482 = vpop.f32.mrb[0].mxu0
        %v1483 = vadd.f32 0.0, %v1482
        %v1484 = vpop.f32.mrb[0].mxu0
        %1485 = vdwg.mxu0
        %v1486 = vadd.f32 %v1133, %v1360
        %v1487 = vadd.f32 %v1134, %v1363
        %v1488 = vadd.f32 %v1135, %v1368
        %v1489 = vadd.f32 %v1136, %v1371
        %v1490 = vadd.f32 %v1137, %v1376
        %v1491 = vadd.f32 %v1138, %v1379
        %v1492 = vadd.f32 %v1139, %v1384
        %v1493 = vadd.f32 %v1140, %v1387
        %v1494 = vadd.f32 %v1141, %v1392
        %v1495 = vadd.f32 %v1142, %v1395
        %v1496 = vadd.f32 %v1143, %v1400
        %v1497 = vadd.f32 %v1144, %v1403
        %v1498 = vadd.f32 %v1145, %v1408
        %v1499 = vadd.f32 %v1146, %v1411
        %v1500 = vadd.f32 %v1147, %v1416
        %v1501 = vadd.f32 %v1148, %v1419
        %v1502 = vadd.f32 %v1149, %v1424
        %v1503 = vadd.f32 %v1150, %v1427
        %v1504 = vadd.f32 %v1151, %v1432
        %v1505 = vadd.f32 %v1152, %v1435
        %v1506 = vadd.f32 %v1153, %v1440
        %v1507 = vadd.f32 %v1154, %v1443
        %v1508 = vadd.f32 %v1155, %v1448
        %v1509 = vadd.f32 %v1156, %v1451
        %v1510 = vadd.f32 %v1157, %v1456
        %v1511 = vadd.f32 %v1158, %v1459
        %v1512 = vadd.f32 %v1159, %v1464
        %v1513 = vadd.f32 %v1160, %v1467
        %v1514 = vadd.f32 %v1161, %v1472
        %v1515 = vadd.f32 %v1162, %v1475
        %v1516 = vadd.f32 %v1163, %v1480
        %v1517 = vadd.f32 %v1164, %v1483
        %1518 = vst.msk [vmem:[%s1132] sm:$0xff] %vm1099, %v1486
        %1519 = vst.msk [vmem:[%s1132 + $0x8] sm:$0xff] %vm1099, %v1487
        %1520 = vst.msk [vmem:[%s1132 + $0x10] sm:$0xff] %vm1099, %v1488
        %1521 = vst.msk [vmem:[%s1132 + $0x18] sm:$0xff] %vm1099, %v1489
        %1522 = vst.msk [vmem:[%s1132 + $0x20] sm:$0xff] %vm1099, %v1490
        %1523 = vst.msk [vmem:[%s1132 + $0x28] sm:$0xff] %vm1099, %v1491
        %1524 = vst.msk [vmem:[%s1132 + $0x30] sm:$0xff] %vm1099, %v1492
        %1525 = vst.msk [vmem:[%s1132 + $0x38] sm:$0xff] %vm1099, %v1493
        %1526 = vst.msk [vmem:[%s1132 + $0x40] sm:$0xff] %vm1099, %v1494
        %1527 = vst.msk [vmem:[%s1132 + $0x48] sm:$0xff] %vm1099, %v1495
        %1528 = vst.msk [vmem:[%s1132 + $0x50] sm:$0xff] %vm1099, %v1496
        %1529 = vst.msk [vmem:[%s1132 + $0x58] sm:$0xff] %vm1099, %v1497
        %1530 = vst.msk [vmem:[%s1132 + $0x60] sm:$0xff] %vm1099, %v1498
        %1531 = vst.msk [vmem:[%s1132 + $0x68] sm:$0xff] %vm1099, %v1499
        %1532 = vst.msk [vmem:[%s1132 + $0x70] sm:$0xff] %vm1099, %v1500
        %1533 = vst.msk [vmem:[%s1132 + $0x78] sm:$0xff] %vm1099, %v1501
        %1534 = vst.msk [vmem:[%s1132 + $0x80] sm:$0xff] %vm1099, %v1502
        %1535 = vst.msk [vmem:[%s1132 + $0x88] sm:$0xff] %vm1099, %v1503
        %1536 = vst.msk [vmem:[%s1132 + $0x90] sm:$0xff] %vm1099, %v1504
        %1537 = vst.msk [vmem:[%s1132 + $0x98] sm:$0xff] %vm1099, %v1505
        %1538 = vst.msk [vmem:[%s1132 + $0xa0] sm:$0xff] %vm1099, %v1506
        %1539 = vst.msk [vmem:[%s1132 + $0xa8] sm:$0xff] %vm1099, %v1507
        %1540 = vst.msk [vmem:[%s1132 + $0xb0] sm:$0xff] %vm1099, %v1508
        %1541 = vst.msk [vmem:[%s1132 + $0xb8] sm:$0xff] %vm1099, %v1509
        %1542 = vst.msk [vmem:[%s1132 + $0xc0] sm:$0xff] %vm1099, %v1510
        %1543 = vst.msk [vmem:[%s1132 + $0xc8] sm:$0xff] %vm1099, %v1511
        %1544 = vst.msk [vmem:[%s1132 + $0xd0] sm:$0xff] %vm1099, %v1512
        %1545 = vst.msk [vmem:[%s1132 + $0xd8] sm:$0xff] %vm1099, %v1513
        %1546 = vst.msk [vmem:[%s1132 + $0xe0] sm:$0xff] %vm1099, %v1514
        %1547 = vst.msk [vmem:[%s1132 + $0xe8] sm:$0xff] %vm1099, %v1515
        %1548 = vst.msk [vmem:[%s1132 + $0xf0] sm:$0xff] %vm1099, %v1516
        %1549 = vst.msk [vmem:[%s1132 + $0xf8] sm:$0xff] %vm1099, %v1517
        %s1550 = scalar_lea.vmem %s321, 512
        %v1551 = vld [vmem:[%s1550] sm:$0xff]
        %v1552 = vld [vmem:[%s1550 + $0x8] sm:$0xff]
        %v1553 = vld [vmem:[%s1550 + $0x10] sm:$0xff]
        %v1554 = vld [vmem:[%s1550 + $0x18] sm:$0xff]
        %v1555 = vld [vmem:[%s1550 + $0x20] sm:$0xff]
        %v1556 = vld [vmem:[%s1550 + $0x28] sm:$0xff]
        %v1557 = vld [vmem:[%s1550 + $0x30] sm:$0xff]
        %v1558 = vld [vmem:[%s1550 + $0x38] sm:$0xff]
        %v1559 = vld [vmem:[%s1550 + $0x40] sm:$0xff]
        %v1560 = vld [vmem:[%s1550 + $0x48] sm:$0xff]
        %v1561 = vld [vmem:[%s1550 + $0x50] sm:$0xff]
        %v1562 = vld [vmem:[%s1550 + $0x58] sm:$0xff]
        %v1563 = vld [vmem:[%s1550 + $0x60] sm:$0xff]
        %v1564 = vld [vmem:[%s1550 + $0x68] sm:$0xff]
        %v1565 = vld [vmem:[%s1550 + $0x70] sm:$0xff]
        %v1566 = vld [vmem:[%s1550 + $0x78] sm:$0xff]
        %v1567 = vld [vmem:[%s1550 + $0x80] sm:$0xff]
        %v1568 = vld [vmem:[%s1550 + $0x88] sm:$0xff]
        %v1569 = vld [vmem:[%s1550 + $0x90] sm:$0xff]
        %v1570 = vld [vmem:[%s1550 + $0x98] sm:$0xff]
        %v1571 = vld [vmem:[%s1550 + $0xa0] sm:$0xff]
        %v1572 = vld [vmem:[%s1550 + $0xa8] sm:$0xff]
        %v1573 = vld [vmem:[%s1550 + $0xb0] sm:$0xff]
        %v1574 = vld [vmem:[%s1550 + $0xb8] sm:$0xff]
        %v1575 = vld [vmem:[%s1550 + $0xc0] sm:$0xff]
        %v1576 = vld [vmem:[%s1550 + $0xc8] sm:$0xff]
        %v1577 = vld [vmem:[%s1550 + $0xd0] sm:$0xff]
        %v1578 = vld [vmem:[%s1550 + $0xd8] sm:$0xff]
        %v1579 = vld [vmem:[%s1550 + $0xe0] sm:$0xff]
        %v1580 = vld [vmem:[%s1550 + $0xe8] sm:$0xff]
        %v1581 = vld [vmem:[%s1550 + $0xf0] sm:$0xff]
        %v1582 = vld [vmem:[%s1550 + $0xf8] sm:$0xff]
        %v1584 = vlaneseq
        %v1585 = vshrl.u32 %v1584, 7
        %v1586 = vsub.s32 0, %v1585
        %v1587 = vrot.slane %v430, %v1586
        %v1588 = vlaneseq
        %v1589 = vshrl.u32 %v1588, 7
        %v1590 = vsub.s32 1, %v1589
        %v1591 = vrot.slane %v430, %v1590
        %v1594 = vsel %vm546, %v1587, 0.0
        %v1595 = vsel %vm547, %v1591, 0.0
        %v1596 = vsel %vm548, %v1587, 0.0
        %v1597 = vsel %vm549, %v1591, 0.0
        %v1598 = vsel %vm550, %v1587, 0.0
        %v1599 = vsel %vm551, %v1591, 0.0
        %v1600 = vsel %vm552, %v1587, 0.0
        %v1601 = vsel %vm553, %v1591, 0.0
        %v1602 = vsel %vm554, %v1587, 0.0
        %v1603 = vsel %vm555, %v1591, 0.0
        %v1604 = vsel %vm556, %v1587, 0.0
        %v1605 = vsel %vm557, %v1591, 0.0
        %v1606 = vsel %vm558, %v1587, 0.0
        %v1607 = vsel %vm559, %v1591, 0.0
        %v1608 = vsel %vm560, %v1587, 0.0
        %v1609 = vsel %vm561, %v1591, 0.0
        %v1610 = vsel %vm562, %v1587, 0.0
        %v1611 = vsel %vm563, %v1591, 0.0
        %v1612 = vsel %vm564, %v1587, 0.0
        %v1613 = vsel %vm565, %v1591, 0.0
        %v1614 = vsel %vm566, %v1587, 0.0
        %v1615 = vsel %vm567, %v1591, 0.0
        %v1616 = vsel %vm568, %v1587, 0.0
        %v1617 = vsel %vm569, %v1591, 0.0
        %v1618 = vsel %vm570, %v1587, 0.0
        %v1619 = vsel %vm571, %v1591, 0.0
        %v1620 = vsel %vm572, %v1587, 0.0
        %v1621 = vsel %vm573, %v1591, 0.0
        %v1622 = vsel %vm574, %v1587, 0.0
        %v1623 = vsel %vm575, %v1591, 0.0
        %v1624 = vsel %vm576, %v1587, 0.0
        %v1625 = vsel %vm577, %v1591, 0.0
        %v1626 = vsel %vm578, %v1587, 0.0
        %v1627 = vsel %vm579, %v1591, 0.0
        %v1628 = vsel %vm580, %v1587, 0.0
        %v1629 = vsel %vm581, %v1591, 0.0
        %v1630 = vsel %vm582, %v1587, 0.0
        %v1631 = vsel %vm583, %v1591, 0.0
        %v1632 = vsel %vm584, %v1587, 0.0
        %v1633 = vsel %vm585, %v1591, 0.0
        %v1634 = vsel %vm586, %v1587, 0.0
        %v1635 = vsel %vm587, %v1591, 0.0
        %v1636 = vsel %vm588, %v1587, 0.0
        %v1637 = vsel %vm589, %v1591, 0.0
        %v1638 = vsel %vm590, %v1587, 0.0
        %v1639 = vsel %vm591, %v1591, 0.0
        %v1640 = vsel %vm592, %v1587, 0.0
        %v1641 = vsel %vm593, %v1591, 0.0
        %v1642 = vsel %vm594, %v1587, 0.0
        %v1643 = vsel %vm595, %v1591, 0.0
        %v1644 = vsel %vm596, %v1587, 0.0
        %v1645 = vsel %vm597, %v1591, 0.0
        %v1646 = vsel %vm598, %v1587, 0.0
        %v1647 = vsel %vm599, %v1591, 0.0
        %v1648 = vsel %vm600, %v1587, 0.0
        %v1649 = vsel %vm601, %v1591, 0.0
        %v1650 = vsel %vm602, %v1587, 0.0
        %v1651 = vsel %vm603, %v1591, 0.0
        %v1652 = vsel %vm604, %v1587, 0.0
        %v1653 = vsel %vm605, %v1591, 0.0
        %v1654 = vsel %vm606, %v1587, 0.0
        %v1655 = vsel %vm607, %v1591, 0.0
        %v1656 = vsel %vm608, %v1587, 0.0
        %v1657 = vsel %vm609, %v1591, 0.0
        %1658 = vmatprep.subr.mxu0 0.0
        %1659 = vmatpush1.msra.mxu0 %v437
        %1660 = vmatprep.subr.mxu0 0.0
        %1661 = vmatpush1.msra.mxu0 %v438
        %1662 = vmatprep.subr.mxu0 0.0
        %1663 = vmatpush1.msra.mxu0 %v439
        %1664 = vmatprep.subr.mxu0 0.0
        %1665 = vmatpush1.msra.mxu0 %v440
        %1666 = vmatprep.subr.mxu0 0.0
        %1667 = vmatpush1.msra.mxu0 %v441
        %1668 = vmatprep.subr.mxu0 0.0
        %1669 = vmatpush1.msra.mxu0 %v442
        %1670 = vmatprep.subr.mxu0 0.0
        %1671 = vmatpush1.msra.mxu0 %v443
        %1672 = vmatprep.subr.mxu0 0.0
        %1673 = vmatpush1.msra.mxu0 %v444
        %1674 = vmatprep.subr.mxu0 0.0
        %1675 = vmatpush1.msra.mxu0 %v445
        %1676 = vmatprep.subr.mxu0 0.0
        %1677 = vmatpush1.msra.mxu0 %v446
        %1678 = vmatprep.subr.mxu0 0.0
        %1679 = vmatpush1.msra.mxu0 %v447
        %1680 = vmatprep.subr.mxu0 0.0
        %1681 = vmatpush1.msra.mxu0 %v448
        %1682 = vmatprep.subr.mxu0 0.0
        %1683 = vmatpush1.msra.mxu0 %v449
        %1684 = vmatprep.subr.mxu0 0.0
        %1685 = vmatpush1.msra.mxu0 %v450
        %1686 = vmatprep.subr.mxu0 0.0
        %1687 = vmatpush1.msra.mxu0 %v451
        %1688 = vmatprep.subr.mxu0 0.0
        %1689 = vmatpush1.msra.mxu0 %v452
        %1690 = vmatprep.subr.mxu0 0.0
        %1691 = vmatpush1.msra.mxu0 %v453
        %1692 = vmatprep.subr.mxu0 0.0
        %1693 = vmatpush1.msra.mxu0 %v454
        %1694 = vmatprep.subr.mxu0 0.0
        %1695 = vmatpush1.msra.mxu0 %v455
        %1696 = vmatprep.subr.mxu0 0.0
        %1697 = vmatpush1.msra.mxu0 %v456
        %1698 = vmatprep.subr.mxu0 0.0
        %1699 = vmatpush1.msra.mxu0 %v457
        %1700 = vmatprep.subr.mxu0 0.0
        %1701 = vmatpush1.msra.mxu0 %v458
        %1702 = vmatprep.subr.mxu0 0.0
        %1703 = vmatpush1.msra.mxu0 %v459
        %1704 = vmatprep.subr.mxu0 0.0
        %1705 = vmatpush1.msra.mxu0 %v460
        %1706 = vmatprep.subr.mxu0 0.0
        %1707 = vmatpush1.msra.mxu0 %v461
        %1708 = vmatprep.subr.mxu0 0.0
        %1709 = vmatpush1.msra.mxu0 %v462
        %1710 = vmatprep.subr.mxu0 0.0
        %1711 = vmatpush1.msra.mxu0 %v463
        %1712 = vmatprep.subr.mxu0 0.0
        %1713 = vmatpush1.msra.mxu0 %v464
        %1714 = vmatprep.subr.mxu0 0.0
        %1715 = vmatpush1.msra.mxu0 %v465
        %1716 = vmatprep.subr.mxu0 0.0
        %1717 = vmatpush1.msra.mxu0 %v466
        %1718 = vmatprep.subr.mxu0 0.0
        %1719 = vmatpush1.msra.mxu0 %v467
        %1720 = vmatprep.subr.mxu0 0.0
        %1721 = vmatpush1.msra.mxu0 %v468
        %1722 = vmatprep.mubr.f32.mxu0 %v1595
        %1723 = vmatmul.mubr.f32.gmra.mrb[0].mxu0 %v1594
        %v1724 = vpop.f32.mrb[0].mxu0
        %v1725 = vadd.f32 0.0, %v1724
        %v1726 = vpop.f32.mrb[0].mxu0
        %1727 = vmatprep.mubr.f32.mxu0 %v1597
        %1728 = vmatmul.mubr.f32.gmra.mrb[0].mxu0 %v1596
        %v1729 = vpop.f32.mrb[0].mxu0
        %v1730 = vadd.f32 0.0, %v1729
        %v1731 = vpop.f32.mrb[0].mxu0
        %1732 = vmatprep.mubr.f32.mxu0 %v1599
        %1733 = vmatmul.mubr.f32.gmra.mrb[0].mxu0 %v1598
        %v1734 = vpop.f32.mrb[0].mxu0
        %v1735 = vadd.f32 0.0, %v1734
        %v1736 = vpop.f32.mrb[0].mxu0
        %1737 = vmatprep.mubr.f32.mxu0 %v1601
        %1738 = vmatmul.mubr.f32.gmra.mrb[0].mxu0 %v1600
        %v1739 = vpop.f32.mrb[0].mxu0
        %v1740 = vadd.f32 0.0, %v1739
        %v1741 = vpop.f32.mrb[0].mxu0
        %1742 = vmatprep.mubr.f32.mxu0 %v1603
        %1743 = vmatmul.mubr.f32.gmra.mrb[0].mxu0 %v1602
        %v1744 = vpop.f32.mrb[0].mxu0
        %v1745 = vadd.f32 0.0, %v1744
        %v1746 = vpop.f32.mrb[0].mxu0
        %1747 = vmatprep.mubr.f32.mxu0 %v1605
        %1748 = vmatmul.mubr.f32.gmra.mrb[0].mxu0 %v1604
        %v1749 = vpop.f32.mrb[0].mxu0
        %v1750 = vadd.f32 0.0, %v1749
        %v1751 = vpop.f32.mrb[0].mxu0
        %1752 = vmatprep.mubr.f32.mxu0 %v1607
        %1753 = vmatmul.mubr.f32.gmra.mrb[0].mxu0 %v1606
        %v1754 = vpop.f32.mrb[0].mxu0
        %v1755 = vadd.f32 0.0, %v1754
        %v1756 = vpop.f32.mrb[0].mxu0
        %1757 = vmatprep.mubr.f32.mxu0 %v1609
        %1758 = vmatmul.mubr.f32.gmra.mrb[0].mxu0 %v1608
        %v1759 = vpop.f32.mrb[0].mxu0
        %v1760 = vadd.f32 0.0, %v1759
        %v1761 = vpop.f32.mrb[0].mxu0
        %1762 = vmatprep.mubr.f32.mxu0 %v1611
        %1763 = vmatmul.mubr.f32.gmra.mrb[0].mxu0 %v1610
        %v1764 = vpop.f32.mrb[0].mxu0
        %v1765 = vadd.f32 0.0, %v1764
        %v1766 = vpop.f32.mrb[0].mxu0
        %1767 = vmatprep.mubr.f32.mxu0 %v1613
        %1768 = vmatmul.mubr.f32.gmra.mrb[0].mxu0 %v1612
        %v1769 = vpop.f32.mrb[0].mxu0
        %v1770 = vadd.f32 0.0, %v1769
        %v1771 = vpop.f32.mrb[0].mxu0
        %1772 = vmatprep.mubr.f32.mxu0 %v1615
        %1773 = vmatmul.mubr.f32.gmra.mrb[0].mxu0 %v1614
        %v1774 = vpop.f32.mrb[0].mxu0
        %v1775 = vadd.f32 0.0, %v1774
        %v1776 = vpop.f32.mrb[0].mxu0
        %1777 = vmatprep.mubr.f32.mxu0 %v1617
        %1778 = vmatmul.mubr.f32.gmra.mrb[0].mxu0 %v1616
        %v1779 = vpop.f32.mrb[0].mxu0
        %v1780 = vadd.f32 0.0, %v1779
        %v1781 = vpop.f32.mrb[0].mxu0
        %1782 = vmatprep.mubr.f32.mxu0 %v1619
        %1783 = vmatmul.mubr.f32.gmra.mrb[0].mxu0 %v1618
        %v1784 = vpop.f32.mrb[0].mxu0
        %v1785 = vadd.f32 0.0, %v1784
        %v1786 = vpop.f32.mrb[0].mxu0
        %1787 = vmatprep.mubr.f32.mxu0 %v1621
        %1788 = vmatmul.mubr.f32.gmra.mrb[0].mxu0 %v1620
        %v1789 = vpop.f32.mrb[0].mxu0
        %v1790 = vadd.f32 0.0, %v1789
        %v1791 = vpop.f32.mrb[0].mxu0
        %1792 = vmatprep.mubr.f32.mxu0 %v1623
        %1793 = vmatmul.mubr.f32.gmra.mrb[0].mxu0 %v1622
        %v1794 = vpop.f32.mrb[0].mxu0
        %v1795 = vadd.f32 0.0, %v1794
        %v1796 = vpop.f32.mrb[0].mxu0
        %1797 = vmatprep.mubr.f32.mxu0 %v1625
        %1798 = vmatmul.mubr.f32.gmra.mrb[0].mxu0 %v1624
        %v1799 = vpop.f32.mrb[0].mxu0
        %v1800 = vadd.f32 0.0, %v1799
        %v1801 = vpop.f32.mrb[0].mxu0
        %1802 = vmatprep.mubr.f32.mxu0 %v1627
        %1803 = vmatmul.mubr.f32.gmra.mrb[0].mxu0 %v1626
        %v1804 = vpop.f32.mrb[0].mxu0
        %v1805 = vadd.f32 0.0, %v1804
        %v1806 = vpop.f32.mrb[0].mxu0
        %1807 = vmatprep.mubr.f32.mxu0 %v1629
        %1808 = vmatmul.mubr.f32.gmra.mrb[0].mxu0 %v1628
        %v1809 = vpop.f32.mrb[0].mxu0
        %v1810 = vadd.f32 0.0, %v1809
        %v1811 = vpop.f32.mrb[0].mxu0
        %1812 = vmatprep.mubr.f32.mxu0 %v1631
        %1813 = vmatmul.mubr.f32.gmra.mrb[0].mxu0 %v1630
        %v1814 = vpop.f32.mrb[0].mxu0
        %v1815 = vadd.f32 0.0, %v1814
        %v1816 = vpop.f32.mrb[0].mxu0
        %1817 = vmatprep.mubr.f32.mxu0 %v1633
        %1818 = vmatmul.mubr.f32.gmra.mrb[0].mxu0 %v1632
        %v1819 = vpop.f32.mrb[0].mxu0
        %v1820 = vadd.f32 0.0, %v1819
        %v1821 = vpop.f32.mrb[0].mxu0
        %1822 = vmatprep.mubr.f32.mxu0 %v1635
        %1823 = vmatmul.mubr.f32.gmra.mrb[0].mxu0 %v1634
        %v1824 = vpop.f32.mrb[0].mxu0
        %v1825 = vadd.f32 0.0, %v1824
        %v1826 = vpop.f32.mrb[0].mxu0
        %1827 = vmatprep.mubr.f32.mxu0 %v1637
        %1828 = vmatmul.mubr.f32.gmra.mrb[0].mxu0 %v1636
        %v1829 = vpop.f32.mrb[0].mxu0
        %v1830 = vadd.f32 0.0, %v1829
        %v1831 = vpop.f32.mrb[0].mxu0
        %1832 = vmatprep.mubr.f32.mxu0 %v1639
        %1833 = vmatmul.mubr.f32.gmra.mrb[0].mxu0 %v1638
        %v1834 = vpop.f32.mrb[0].mxu0
        %v1835 = vadd.f32 0.0, %v1834
        %v1836 = vpop.f32.mrb[0].mxu0
        %1837 = vmatprep.mubr.f32.mxu0 %v1641
        %1838 = vmatmul.mubr.f32.gmra.mrb[0].mxu0 %v1640
        %v1839 = vpop.f32.mrb[0].mxu0
        %v1840 = vadd.f32 0.0, %v1839
        %v1841 = vpop.f32.mrb[0].mxu0
        %1842 = vmatprep.mubr.f32.mxu0 %v1643
        %1843 = vmatmul.mubr.f32.gmra.mrb[0].mxu0 %v1642
        %v1844 = vpop.f32.mrb[0].mxu0
        %v1845 = vadd.f32 0.0, %v1844
        %v1846 = vpop.f32.mrb[0].mxu0
        %1847 = vmatprep.mubr.f32.mxu0 %v1645
        %1848 = vmatmul.mubr.f32.gmra.mrb[0].mxu0 %v1644
        %v1849 = vpop.f32.mrb[0].mxu0
        %v1850 = vadd.f32 0.0, %v1849
        %v1851 = vpop.f32.mrb[0].mxu0
        %1852 = vmatprep.mubr.f32.mxu0 %v1647
        %1853 = vmatmul.mubr.f32.gmra.mrb[0].mxu0 %v1646
        %v1854 = vpop.f32.mrb[0].mxu0
        %v1855 = vadd.f32 0.0, %v1854
        %v1856 = vpop.f32.mrb[0].mxu0
        %1857 = vmatprep.mubr.f32.mxu0 %v1649
        %1858 = vmatmul.mubr.f32.gmra.mrb[0].mxu0 %v1648
        %v1859 = vpop.f32.mrb[0].mxu0
        %v1860 = vadd.f32 0.0, %v1859
        %v1861 = vpop.f32.mrb[0].mxu0
        %1862 = vmatprep.mubr.f32.mxu0 %v1651
        %1863 = vmatmul.mubr.f32.gmra.mrb[0].mxu0 %v1650
        %v1864 = vpop.f32.mrb[0].mxu0
        %v1865 = vadd.f32 0.0, %v1864
        %v1866 = vpop.f32.mrb[0].mxu0
        %1867 = vmatprep.mubr.f32.mxu0 %v1653
        %1868 = vmatmul.mubr.f32.gmra.mrb[0].mxu0 %v1652
        %v1869 = vpop.f32.mrb[0].mxu0
        %v1870 = vadd.f32 0.0, %v1869
        %v1871 = vpop.f32.mrb[0].mxu0
        %1872 = vmatprep.mubr.f32.mxu0 %v1655
        %1873 = vmatmul.mubr.f32.gmra.mrb[0].mxu0 %v1654
        %v1874 = vpop.f32.mrb[0].mxu0
        %v1875 = vadd.f32 0.0, %v1874
        %v1876 = vpop.f32.mrb[0].mxu0
        %1877 = vmatprep.mubr.f32.mxu0 %v1657
        %1878 = vmatmul.mubr.f32.gmra.mrb[0].mxu0 %v1656
        %v1879 = vpop.f32.mrb[0].mxu0
        %v1880 = vadd.f32 0.0, %v1879
        %v1881 = vpop.f32.mrb[0].mxu0
        %1882 = vdwg.mxu0
        %v1883 = vadd.f32 %v1551, %v1725
        %v1884 = vadd.f32 %v1552, %v1730
        %v1885 = vadd.f32 %v1553, %v1735
        %v1886 = vadd.f32 %v1554, %v1740
        %v1887 = vadd.f32 %v1555, %v1745
        %v1888 = vadd.f32 %v1556, %v1750
        %v1889 = vadd.f32 %v1557, %v1755
        %v1890 = vadd.f32 %v1558, %v1760
        %v1891 = vadd.f32 %v1559, %v1765
        %v1892 = vadd.f32 %v1560, %v1770
        %v1893 = vadd.f32 %v1561, %v1775
        %v1894 = vadd.f32 %v1562, %v1780
        %v1895 = vadd.f32 %v1563, %v1785
        %v1896 = vadd.f32 %v1564, %v1790
        %v1897 = vadd.f32 %v1565, %v1795
        %v1898 = vadd.f32 %v1566, %v1800
        %v1899 = vadd.f32 %v1567, %v1805
        %v1900 = vadd.f32 %v1568, %v1810
        %v1901 = vadd.f32 %v1569, %v1815
        %v1902 = vadd.f32 %v1570, %v1820
        %v1903 = vadd.f32 %v1571, %v1825
        %v1904 = vadd.f32 %v1572, %v1830
        %v1905 = vadd.f32 %v1573, %v1835
        %v1906 = vadd.f32 %v1574, %v1840
        %v1907 = vadd.f32 %v1575, %v1845
        %v1908 = vadd.f32 %v1576, %v1850
        %v1909 = vadd.f32 %v1577, %v1855
        %v1910 = vadd.f32 %v1578, %v1860
        %v1911 = vadd.f32 %v1579, %v1865
        %v1912 = vadd.f32 %v1580, %v1870
        %v1913 = vadd.f32 %v1581, %v1875
        %v1914 = vadd.f32 %v1582, %v1880
        %1915 = vst.msk [vmem:[%s1550] sm:$0xff] %vm1099, %v1883
        %1916 = vst.msk [vmem:[%s1550 + $0x8] sm:$0xff] %vm1099, %v1884
        %1917 = vst.msk [vmem:[%s1550 + $0x10] sm:$0xff] %vm1099, %v1885
        %1918 = vst.msk [vmem:[%s1550 + $0x18] sm:$0xff] %vm1099, %v1886
        %1919 = vst.msk [vmem:[%s1550 + $0x20] sm:$0xff] %vm1099, %v1887
        %1920 = vst.msk [vmem:[%s1550 + $0x28] sm:$0xff] %vm1099, %v1888
        %1921 = vst.msk [vmem:[%s1550 + $0x30] sm:$0xff] %vm1099, %v1889
        %1922 = vst.msk [vmem:[%s1550 + $0x38] sm:$0xff] %vm1099, %v1890
        %1923 = vst.msk [vmem:[%s1550 + $0x40] sm:$0xff] %vm1099, %v1891
        %1924 = vst.msk [vmem:[%s1550 + $0x48] sm:$0xff] %vm1099, %v1892
        %1925 = vst.msk [vmem:[%s1550 + $0x50] sm:$0xff] %vm1099, %v1893
        %1926 = vst.msk [vmem:[%s1550 + $0x58] sm:$0xff] %vm1099, %v1894
        %1927 = vst.msk [vmem:[%s1550 + $0x60] sm:$0xff] %vm1099, %v1895
        %1928 = vst.msk [vmem:[%s1550 + $0x68] sm:$0xff] %vm1099, %v1896
        %1929 = vst.msk [vmem:[%s1550 + $0x70] sm:$0xff] %vm1099, %v1897
        %1930 = vst.msk [vmem:[%s1550 + $0x78] sm:$0xff] %vm1099, %v1898
        %1931 = vst.msk [vmem:[%s1550 + $0x80] sm:$0xff] %vm1099, %v1899
        %1932 = vst.msk [vmem:[%s1550 + $0x88] sm:$0xff] %vm1099, %v1900
        %1933 = vst.msk [vmem:[%s1550 + $0x90] sm:$0xff] %vm1099, %v1901
        %1934 = vst.msk [vmem:[%s1550 + $0x98] sm:$0xff] %vm1099, %v1902
        %1935 = vst.msk [vmem:[%s1550 + $0xa0] sm:$0xff] %vm1099, %v1903
        %1936 = vst.msk [vmem:[%s1550 + $0xa8] sm:$0xff] %vm1099, %v1904
        %1937 = vst.msk [vmem:[%s1550 + $0xb0] sm:$0xff] %vm1099, %v1905
        %1938 = vst.msk [vmem:[%s1550 + $0xb8] sm:$0xff] %vm1099, %v1906
        %1939 = vst.msk [vmem:[%s1550 + $0xc0] sm:$0xff] %vm1099, %v1907
        %1940 = vst.msk [vmem:[%s1550 + $0xc8] sm:$0xff] %vm1099, %v1908
        %1941 = vst.msk [vmem:[%s1550 + $0xd0] sm:$0xff] %vm1099, %v1909
        %1942 = vst.msk [vmem:[%s1550 + $0xd8] sm:$0xff] %vm1099, %v1910
        %1943 = vst.msk [vmem:[%s1550 + $0xe0] sm:$0xff] %vm1099, %v1911
        %1944 = vst.msk [vmem:[%s1550 + $0xe8] sm:$0xff] %vm1099, %v1912
        %1945 = vst.msk [vmem:[%s1550 + $0xf0] sm:$0xff] %vm1099, %v1913
        %1946 = vst.msk [vmem:[%s1550 + $0xf8] sm:$0xff] %vm1099, %v1914
        %s1947 = smul.u32 3, %s25
        %p1948 = scmp.lt.s32.totalorder %s1947, 8
        %s1949 = scalar_select %p1948, %s1947, 8
        %s1950 = smul.addr %s1949, 32
        %s1951 = smul.addr %s1950, 8
        %s1952 = scalar_lea.vmem %s4, %s1951
        // Predicated region
        $region49: #{tpu_custom_call.1} parent=35 // pred_check
          %p1953 = pneg %p159
        $region50: #{tpu_custom_call.1} parent=35 // pred_check_branch
          %1955 = sbr.rel (%p1953) target = $region52
        $region51: #{tpu_custom_call.1} parent=35 // pred_region
          %s1956 = smul.u32 3, %s25
        $region52: #{tpu_custom_call.1} parent=35 // pred_fallthru
          _
      $region36: #{tpu_custom_call.1} parent=5 // pred_fallthru
        _
      %p1957 = scmp.le.s32.totalorder 2, %s16
      // Predicated region
      $region53: #{tpu_custom_call.1} parent=5 // pred_check
        %p1958 = pneg %p1957
      $region54: #{tpu_custom_call.1} parent=5 // pred_check_branch
        %1960 = sbr.rel (%p1958) target = $region56
      $region55: #{tpu_custom_call.1} parent=5 // pred_region
        %s1961 = ssub.s32 %s16, 2
        // Predicated region
        $region57: #{tpu_custom_call.1} parent=55 // pred_check
          %p1962 = pneg %p165
        $region58: #{tpu_custom_call.1} parent=55 // pred_check_branch
          %1964 = sbr.rel (%p1962) target = $region60
        $region59: #{tpu_custom_call.1} parent=55 // pred_region
          %s1965 = smul.u32 3, %s27
          %p1966 = scmp.lt.s32.totalorder %s1965, 8
          %s1967 = scalar_select %p1966, %s1965, 8
          %s1968 = smul.addr %s1967, 32
          %s1969 = smul.addr %s1968, 8
          %s1970 = scalar_lea.vmem %s4, %s1969
        $region60: #{tpu_custom_call.1} parent=55 // pred_fallthru
          _
      $region56: #{tpu_custom_call.1} parent=5 // pred_fallthru
        _
    $region6: #{tpu_custom_call.1} parent=1 // loop_footer
      %s20 = sadd.s32 1, %s16
    $region7: #{tpu_custom_call.1} parent=1 // loop_footer_branch
      %15 = sbr.rel target = $region3
    $region8: #{tpu_custom_call.1} parent=1 // loop_exit
      _
    %1971 = vsyncpa [#allocation3], 1
    %s1972 = scalar_lea.sflag [#allocation3], 1
    %1973 = vsyncpa %s1972, 1
    %1974 = vsyncpa [#allocation5], 1
    %s1975 = scalar_lea.sflag [#allocation5], 1
    %1976 = vsyncpa %s1975, 1

</llo_original>
